<compile_context>
chip_gen: v7x
topology: tpu7x:2x2x1
jax: 0.10.0
libtpu: 0.0.40
codegen_flags: <defaults>
</compile_context>

<pallas_src>
import jax
import jax.numpy as jnp
from jax.experimental import pallas as pl
from jax.experimental.pallas import tpu as pltpu


def _attention_kernel(x_ref, wqkv_ref, wo_ref, bo_ref, o_ref,
                      q_s, k_s, v_s, att_s):
    """One batch tile (block_b batch rows, full sequence) per grid step.

    x_ref    : (block_b, n, D_pad)           bf16 input tile
    wqkv_ref : (D_pad, 3*heads*d_pad)        bf16 fused [Q|K|V] weights (scale in Q)
    wo_ref   : (heads*d_pad, D_pad)          bf16 output projection, heads on rows
    bo_ref   : (1, D_pad)                    f32  output bias
    o_ref    : (block_b, n, D_pad)           bf16 output tile
    q_s/k_s/v_s : (heads*block_b, n, d_pad)  bf16 VMEM scratch (per-(head,batch))
    att_s    : (block_b*n, heads*d_pad)      bf16 VMEM scratch (heads re-packed on lanes)
    """
    block_b, n, D_pad = x_ref.shape
    R = block_b * n
    d_pad = q_s.shape[-1]
    heads = q_s.shape[0] // block_b
    HW = heads * d_pad                      # lane width of one Q/K/V section

    x2 = x_ref[...].reshape(R, D_pad)       # (R, D_pad) bf16

    # ---- Fused Q/K/V projection: x streamed through the MXU exactly once. ---
    qkv = jnp.dot(x2, wqkv_ref[...], preferred_element_type=jnp.float32)
    qkv = qkv.astype(jnp.bfloat16)          # (R, 3*heads*d_pad)

    # Split the lane-packed heads into the (head*batch, n, d_pad) layout the
    # per-head attention matmuls need.  Every slice is lane-tile(128)- and
    # sublane-aligned: these are cheap vreg->VMEM copies, not matmuls.
    for h in range(heads):
        col = h * d_pad
        for bb in range(block_b):
            g = h * block_b + bb
            rows = slice(bb * n, (bb + 1) * n)
            q_s[g] = qkv[rows, col:col + d_pad]
            k_s[g] = qkv[rows, HW + col:HW + col + d_pad]
            v_s[g] = qkv[rows, 2 * HW + col:2 * HW + col + d_pad]

    # ---- Scaled dot-product attention, batched over (head, batch). ----------
    # (scale already folded into the Q weights; softmax math stays in f32)
    scores = jnp.einsum("gqd,gkd->gqk", q_s[...], k_s[...],
                        preferred_element_type=jnp.float32)   # (G, n, n) f32
    m = jnp.max(scores, axis=-1, keepdims=True)
    e = jnp.exp(scores - m)
    denom = jnp.sum(e, axis=-1, keepdims=True)
    p = (e * pl.reciprocal(denom, approx=True)).astype(jnp.bfloat16)
    out = jnp.einsum("gqk,gkd->gqd", p, v_s[...],
                     preferred_element_type=jnp.float32).astype(jnp.bfloat16)

    # Re-pack heads onto the lane axis: 'b h n d -> b n (h d)'.
    for h in range(heads):
        col = h * d_pad
        for bb in range(block_b):
            att_s[bb * n:(bb + 1) * n, col:col + d_pad] = out[h * block_b + bb]

    # ---- Output projection: one wide-K matmul; the head reduction lives in
    # the MXU f32 accumulator (no (h, R, D) temp, no VPU head-sum). -----------
    proj = jnp.dot(att_s[...], wo_ref[...],
                   preferred_element_type=jnp.float32) + bo_ref[...]
    o_ref[...] = proj.reshape(block_b, n, D_pad).astype(o_ref.dtype)


def _round_up(x, m):
    return (x + m - 1) // m * m


def attention_forward(x, w_qkv, w_out, b_out, *, heads, block_b=None):
    """x: (b, n, 1, D) float32 -> (b, n, D) float32. Weights in (in, out) layout."""
    b, n, one, D = x.shape
    assert one == 1, "forward semantics require the third axis to be 1"
    assert D % heads == 0, "heads must divide the input feature dim"
    dim_head = D // heads
    inner = dim_head * heads
    scale = dim_head ** (-0.5)

    LANE = 128
    D_pad = _round_up(D, LANE)
    d_pad = _round_up(dim_head, LANE)

    if block_b is None:
        # >= 2 grid steps so both v7x TensorCores get work and the pipeline has
        # something to overlap.  For production shapes, size block_b so that
        # block_b * n is a multiple of the MXU height (256 on v6e/v7x, 128 on v5e).
        block_b = 1 if b > 1 else b
    assert b % block_b == 0
    num_blocks = b // block_b

    # ---- fused per-head Q/K/V weight: (D_pad, 3*heads*d_pad), scale in Q. ---
    wq, wk, wv = (w_qkv[:, i * inner:(i + 1) * inner] for i in range(3))

    def expand_heads(w):                    # (D, heads*dim_head) -> (D_pad, heads*d_pad)
        w = w.reshape(D, heads, dim_head)
        buf = jnp.zeros((D_pad, heads, d_pad), w.dtype)
        buf = buf.at[:D, :, :dim_head].set(w)
        return buf.reshape(D_pad, heads * d_pad)

    w_fused = jnp.concatenate(
        [expand_heads(wq * scale), expand_heads(wk), expand_heads(wv)],
        axis=1).astype(jnp.bfloat16)                         # (D_pad, 3*heads*d_pad)

    # ---- output projection, heads flattened on the contracting axis. --------
    wo = w_out.reshape(heads, dim_head, D)
    wo_buf = jnp.zeros((heads, d_pad, D_pad), w_out.dtype)
    wo_buf = wo_buf.at[:, :dim_head, :D].set(wo)
    wo_flat = wo_buf.reshape(heads * d_pad, D_pad).astype(jnp.bfloat16)

    bo = jnp.zeros((1, D_pad), jnp.float32).at[0, :D].set(b_out.astype(jnp.float32))

    x_pad = jnp.zeros((b, n, D_pad), jnp.bfloat16).at[:, :, :D].set(
        x.reshape(b, n, D).astype(jnp.bfloat16))

    # ---- VMEM limit derived from the actual resident set (+ slack). ---------
    bytes_weights = (w_fused.size + wo_flat.size) * 2 + bo.size * 4
    bytes_io = 2 * 2 * (block_b * n * D_pad * 2)          # x + out, double-buffered
    bytes_scratch = (3 * heads * block_b * n * d_pad + block_b * n * heads * d_pad) * 2
    bytes_scores = 3 * heads * block_b * n * n * 4        # scores / exp / probs temps
    resident = bytes_weights + bytes_io + bytes_scratch + bytes_scores
    vmem_limit = int(min(max(2 * resident + (4 << 20), 16 << 20), 48 << 20))

    out_pad = pl.pallas_call(
        _attention_kernel,
        out_shape=jax.ShapeDtypeStruct((b, n, D_pad), jnp.bfloat16),
        grid_spec=pltpu.PrefetchScalarGridSpec(
            num_scalar_prefetch=0,
            grid=(num_blocks,),
            in_specs=[
                pl.BlockSpec((block_b, n, D_pad), lambda i: (i, 0, 0)),       # x
                pl.BlockSpec((D_pad, 3 * heads * d_pad), lambda i: (0, 0)),   # W_qkv
                pl.BlockSpec((heads * d_pad, D_pad), lambda i: (0, 0)),       # W_out
                pl.BlockSpec((1, D_pad), lambda i: (0, 0)),                   # bias
            ],
            out_specs=pl.BlockSpec((block_b, n, D_pad), lambda i: (i, 0, 0)),
            scratch_shapes=[
                pltpu.VMEM((heads * block_b, n, d_pad), jnp.bfloat16),  # q
                pltpu.VMEM((heads * block_b, n, d_pad), jnp.bfloat16),  # k
                pltpu.VMEM((heads * block_b, n, d_pad), jnp.bfloat16),  # v
                pltpu.VMEM((block_b * n, heads * d_pad), jnp.bfloat16), # merged heads
            ],
        ),
        compiler_params=pltpu.CompilerParams(
            dimension_semantics=("parallel",),
            vmem_limit_bytes=vmem_limit,
        ),
    )(x_pad, w_fused, wo_flat, bo)

    return out_pad[..., :D].astype(jnp.float32)


def attention_reference(x, w_qkv, w_out, b_out, *, heads):
    """Pure-JAX f32 reference mirroring the PyTorch forward exactly."""
    b, n, _, D = x.shape
    d = D // heads
    scale = d ** (-0.5)
    x3 = x.reshape(b, n, D)
    qkv = x3 @ w_qkv
    q, k, v = jnp.split(qkv, 3, axis=-1)

    def to_heads(t):
        return t.reshape(b, n, heads, d).transpose(0, 2, 1, 3)

    q, k, v = map(to_heads, (q, k, v))
    dots = jnp.einsum("bhid,bhjd->bhij", q, k) * scale
    attn = jax.nn.softmax(dots, axis=-1)
    out = jnp.einsum("bhij,bhjd->bhid", attn, v)
    out = out.transpose(0, 2, 1, 3).reshape(b, n, D)
    return out @ w_out + b_out


if __name__ == "__main__":
    # Module hyperparameters (synthetic, small).
    t_input_dim = 32
    nheads = 4
    dropout = 0.1        # inactive in eval/forward path

    b, n = 2, 8
    key = jax.random.PRNGKey(0)
    k_x, k_qkv, k_wout, k_bout = jax.random.split(key, 4)

    # Input matches the PyTorch forward's expected 4-D shape (b, n, 1, D).
    x = jax.random.normal(k_x, (b, n, 1, t_input_dim), dtype=jnp.float32)

    # Deterministic parameter init (stored as (in, out) for direct x @ W).
    inner_dim = (t_input_dim // nheads) * nheads
    w_qkv = jax.random.normal(k_qkv, (t_input_dim, 3 * inner_dim), jnp.float32) * 0.05
    w_out = jax.random.normal(k_wout, (inner_dim, t_input_dim), jnp.float32) * 0.05
    b_out = jax.random.normal(k_bout, (t_input_dim,), jnp.float32) * 0.05

    out = attention_forward(x, w_qkv, w_out, b_out, heads=nheads)
    out = jax.block_until_ready(out)

    ref = attention_reference(x, w_qkv, w_out, b_out, heads=nheads)
    assert out.shape == (b, n, t_input_dim)
    # bf16 MXU operands + bf16 output store + approx reciprocal => ~1e-3 deltas.
    max_diff = float(jnp.max(jnp.abs(out - ref)))
    assert jnp.allclose(out, ref, atol=2e-2, rtol=2e-2), (
        f"mismatch vs reference: max abs diff = {max_diff}")

    print("KERNEL_OK")
</pallas_src>

<mosaic_0001>
module attributes {stable_mosaic.version = 11 : i64} {
  func.func @_attention_kernel(%arg0: i32, %arg1: memref<1x8x128xbf16, #tpu.memory_space<vmem>>, %arg2: memref<128x1536xbf16, #tpu.memory_space<vmem>>, %arg3: memref<512x128xbf16, #tpu.memory_space<vmem>>, %arg4: memref<1x128xf32, #tpu.memory_space<vmem>>, %arg5: memref<1x8x128xbf16, #tpu.memory_space<vmem>>, %arg6: memref<4x8x128xbf16, #tpu.memory_space<vmem>>, %arg7: memref<4x8x128xbf16, #tpu.memory_space<vmem>>, %arg8: memref<4x8x128xbf16, #tpu.memory_space<vmem>>, %arg9: memref<8x512xbf16, #tpu.memory_space<vmem>>) attributes {dimension_semantics = [#tpu.dimension_semantics<parallel>], iteration_bounds = array<i64: 2>, scalar_prefetch = 0 : i64, scratch_operands = 4 : i64, tpu.core_type = #tpu.core_type<tc>, window_params = [{transform_indices = @transform_0, window_bounds = array<i64: 1, 8, 128>}, {pipeline_mode = #tpu.pipeline_mode<synchronous>, transform_indices = @transform_1, window_bounds = array<i64: 128, 1536>}, {pipeline_mode = #tpu.pipeline_mode<synchronous>, transform_indices = @transform_2, window_bounds = array<i64: 512, 128>}, {pipeline_mode = #tpu.pipeline_mode<synchronous>, transform_indices = @transform_3, window_bounds = array<i64: 1, 128>}, {transform_indices = @transform_4, window_bounds = array<i64: 1, 8, 128>}]} {
    %c0 = arith.constant 0 : index
    %c0_0 = arith.constant 0 : index
    %c0_1 = arith.constant 0 : index
    %0 = vector.load %arg1[%c0, %c0_0, %c0_1] : memref<1x8x128xbf16, #tpu.memory_space<vmem>>, vector<1x8x128xbf16>
    %1 = vector.shape_cast %0 : vector<1x8x128xbf16> to vector<8x128xbf16>
    %c0_2 = arith.constant 0 : index
    %c0_3 = arith.constant 0 : index
    %2 = vector.load %arg2[%c0_2, %c0_3] : memref<128x1536xbf16, #tpu.memory_space<vmem>>, vector<128x1536xbf16>
    %cst = arith.constant dense<0.000000e+00> : vector<8x1536xf32>
    %3 = tpu.matmul %1, %2, %cst {dimension_numbers = #tpu.dot_dimension_numbers<[1], [0], [0], [1], [0, 0, 1, 1], [], []>} : vector<8x128xbf16>, vector<128x1536xbf16>, vector<8x1536xf32> -> vector<8x1536xf32>
    %4 = arith.truncf %3 : vector<8x1536xf32> to vector<8x1536xbf16>
    %5 = vector.extract_strided_slice %4 {offsets = [0, 0], sizes = [8, 128], strides = [1, 1]} : vector<8x1536xbf16> to vector<8x128xbf16>
    %c0_4 = arith.constant 0 : index
    %c0_5 = arith.constant 0 : index
    %c0_6 = arith.constant 0 : index
    %6 = vector.load %arg6[%c0_4, %c0_5, %c0_6] : memref<4x8x128xbf16, #tpu.memory_space<vmem>>, vector<1x8x128xbf16>
    %7 = vector.shape_cast %6 : vector<1x8x128xbf16> to vector<8x128xbf16>
    %8 = vector.shape_cast %5 : vector<8x128xbf16> to vector<1x8x128xbf16>
    tpu.vector_store %arg6[%c0_4, %c0_5, %c0_6], %8 {strides = array<i32>} : memref<4x8x128xbf16, #tpu.memory_space<vmem>>, vector<1x8x128xbf16>,
    %9 = vector.extract_strided_slice %4 {offsets = [0, 512], sizes = [8, 128], strides = [1, 1]} : vector<8x1536xbf16> to vector<8x128xbf16>
    %c0_7 = arith.constant 0 : index
    %c0_8 = arith.constant 0 : index
    %c0_9 = arith.constant 0 : index
    %10 = vector.load %arg7[%c0_7, %c0_8, %c0_9] : memref<4x8x128xbf16, #tpu.memory_space<vmem>>, vector<1x8x128xbf16>
    %11 = vector.shape_cast %10 : vector<1x8x128xbf16> to vector<8x128xbf16>
    %12 = vector.shape_cast %9 : vector<8x128xbf16> to vector<1x8x128xbf16>
    tpu.vector_store %arg7[%c0_7, %c0_8, %c0_9], %12 {strides = array<i32>} : memref<4x8x128xbf16, #tpu.memory_space<vmem>>, vector<1x8x128xbf16>,
    %13 = vector.extract_strided_slice %4 {offsets = [0, 1024], sizes = [8, 128], strides = [1, 1]} : vector<8x1536xbf16> to vector<8x128xbf16>
    %c0_10 = arith.constant 0 : index
    %c0_11 = arith.constant 0 : index
    %c0_12 = arith.constant 0 : index
    %14 = vector.load %arg8[%c0_10, %c0_11, %c0_12] : memref<4x8x128xbf16, #tpu.memory_space<vmem>>, vector<1x8x128xbf16>
    %15 = vector.shape_cast %14 : vector<1x8x128xbf16> to vector<8x128xbf16>
    %16 = vector.shape_cast %13 : vector<8x128xbf16> to vector<1x8x128xbf16>
    tpu.vector_store %arg8[%c0_10, %c0_11, %c0_12], %16 {strides = array<i32>} : memref<4x8x128xbf16, #tpu.memory_space<vmem>>, vector<1x8x128xbf16>,
    %17 = vector.extract_strided_slice %4 {offsets = [0, 128], sizes = [8, 128], strides = [1, 1]} : vector<8x1536xbf16> to vector<8x128xbf16>
    %c1 = arith.constant 1 : index
    %c0_13 = arith.constant 0 : index
    %c0_14 = arith.constant 0 : index
    %18 = vector.load %arg6[%c1, %c0_13, %c0_14] : memref<4x8x128xbf16, #tpu.memory_space<vmem>>, vector<1x8x128xbf16>
    %19 = vector.shape_cast %18 : vector<1x8x128xbf16> to vector<8x128xbf16>
    %20 = vector.shape_cast %17 : vector<8x128xbf16> to vector<1x8x128xbf16>
    tpu.vector_store %arg6[%c1, %c0_13, %c0_14], %20 {strides = array<i32>} : memref<4x8x128xbf16, #tpu.memory_space<vmem>>, vector<1x8x128xbf16>,
    %21 = vector.extract_strided_slice %4 {offsets = [0, 640], sizes = [8, 128], strides = [1, 1]} : vector<8x1536xbf16> to vector<8x128xbf16>
    %c1_15 = arith.constant 1 : index
    %c0_16 = arith.constant 0 : index
    %c0_17 = arith.constant 0 : index
    %22 = vector.load %arg7[%c1_15, %c0_16, %c0_17] : memref<4x8x128xbf16, #tpu.memory_space<vmem>>, vector<1x8x128xbf16>
    %23 = vector.shape_cast %22 : vector<1x8x128xbf16> to vector<8x128xbf16>
    %24 = vector.shape_cast %21 : vector<8x128xbf16> to vector<1x8x128xbf16>
    tpu.vector_store %arg7[%c1_15, %c0_16, %c0_17], %24 {strides = array<i32>} : memref<4x8x128xbf16, #tpu.memory_space<vmem>>, vector<1x8x128xbf16>,
    %25 = vector.extract_strided_slice %4 {offsets = [0, 1152], sizes = [8, 128], strides = [1, 1]} : vector<8x1536xbf16> to vector<8x128xbf16>
    %c1_18 = arith.constant 1 : index
    %c0_19 = arith.constant 0 : index
    %c0_20 = arith.constant 0 : index
    %26 = vector.load %arg8[%c1_18, %c0_19, %c0_20] : memref<4x8x128xbf16, #tpu.memory_space<vmem>>, vector<1x8x128xbf16>
    %27 = vector.shape_cast %26 : vector<1x8x128xbf16> to vector<8x128xbf16>
    %28 = vector.shape_cast %25 : vector<8x128xbf16> to vector<1x8x128xbf16>
    tpu.vector_store %arg8[%c1_18, %c0_19, %c0_20], %28 {strides = array<i32>} : memref<4x8x128xbf16, #tpu.memory_space<vmem>>, vector<1x8x128xbf16>,
    %29 = vector.extract_strided_slice %4 {offsets = [0, 256], sizes = [8, 128], strides = [1, 1]} : vector<8x1536xbf16> to vector<8x128xbf16>
    %c2 = arith.constant 2 : index
    %c0_21 = arith.constant 0 : index
    %c0_22 = arith.constant 0 : index
    %30 = vector.load %arg6[%c2, %c0_21, %c0_22] : memref<4x8x128xbf16, #tpu.memory_space<vmem>>, vector<1x8x128xbf16>
    %31 = vector.shape_cast %30 : vector<1x8x128xbf16> to vector<8x128xbf16>
    %32 = vector.shape_cast %29 : vector<8x128xbf16> to vector<1x8x128xbf16>
    tpu.vector_store %arg6[%c2, %c0_21, %c0_22], %32 {strides = array<i32>} : memref<4x8x128xbf16, #tpu.memory_space<vmem>>, vector<1x8x128xbf16>,
    %33 = vector.extract_strided_slice %4 {offsets = [0, 768], sizes = [8, 128], strides = [1, 1]} : vector<8x1536xbf16> to vector<8x128xbf16>
    %c2_23 = arith.constant 2 : index
    %c0_24 = arith.constant 0 : index
    %c0_25 = arith.constant 0 : index
    %34 = vector.load %arg7[%c2_23, %c0_24, %c0_25] : memref<4x8x128xbf16, #tpu.memory_space<vmem>>, vector<1x8x128xbf16>
    %35 = vector.shape_cast %34 : vector<1x8x128xbf16> to vector<8x128xbf16>
    %36 = vector.shape_cast %33 : vector<8x128xbf16> to vector<1x8x128xbf16>
    tpu.vector_store %arg7[%c2_23, %c0_24, %c0_25], %36 {strides = array<i32>} : memref<4x8x128xbf16, #tpu.memory_space<vmem>>, vector<1x8x128xbf16>,
    %37 = vector.extract_strided_slice %4 {offsets = [0, 1280], sizes = [8, 128], strides = [1, 1]} : vector<8x1536xbf16> to vector<8x128xbf16>
    %c2_26 = arith.constant 2 : index
    %c0_27 = arith.constant 0 : index
    %c0_28 = arith.constant 0 : index
    %38 = vector.load %arg8[%c2_26, %c0_27, %c0_28] : memref<4x8x128xbf16, #tpu.memory_space<vmem>>, vector<1x8x128xbf16>
    %39 = vector.shape_cast %38 : vector<1x8x128xbf16> to vector<8x128xbf16>
    %40 = vector.shape_cast %37 : vector<8x128xbf16> to vector<1x8x128xbf16>
    tpu.vector_store %arg8[%c2_26, %c0_27, %c0_28], %40 {strides = array<i32>} : memref<4x8x128xbf16, #tpu.memory_space<vmem>>, vector<1x8x128xbf16>,
    %41 = vector.extract_strided_slice %4 {offsets = [0, 384], sizes = [8, 128], strides = [1, 1]} : vector<8x1536xbf16> to vector<8x128xbf16>
    %c3 = arith.constant 3 : index
    %c0_29 = arith.constant 0 : index
    %c0_30 = arith.constant 0 : index
    %42 = vector.load %arg6[%c3, %c0_29, %c0_30] : memref<4x8x128xbf16, #tpu.memory_space<vmem>>, vector<1x8x128xbf16>
    %43 = vector.shape_cast %42 : vector<1x8x128xbf16> to vector<8x128xbf16>
    %44 = vector.shape_cast %41 : vector<8x128xbf16> to vector<1x8x128xbf16>
    tpu.vector_store %arg6[%c3, %c0_29, %c0_30], %44 {strides = array<i32>} : memref<4x8x128xbf16, #tpu.memory_space<vmem>>, vector<1x8x128xbf16>,
    %45 = vector.extract_strided_slice %4 {offsets = [0, 896], sizes = [8, 128], strides = [1, 1]} : vector<8x1536xbf16> to vector<8x128xbf16>
    %c3_31 = arith.constant 3 : index
    %c0_32 = arith.constant 0 : index
    %c0_33 = arith.constant 0 : index
    %46 = vector.load %arg7[%c3_31, %c0_32, %c0_33] : memref<4x8x128xbf16, #tpu.memory_space<vmem>>, vector<1x8x128xbf16>
    %47 = vector.shape_cast %46 : vector<1x8x128xbf16> to vector<8x128xbf16>
    %48 = vector.shape_cast %45 : vector<8x128xbf16> to vector<1x8x128xbf16>
    tpu.vector_store %arg7[%c3_31, %c0_32, %c0_33], %48 {strides = array<i32>} : memref<4x8x128xbf16, #tpu.memory_space<vmem>>, vector<1x8x128xbf16>,
    %49 = vector.extract_strided_slice %4 {offsets = [0, 1408], sizes = [8, 128], strides = [1, 1]} : vector<8x1536xbf16> to vector<8x128xbf16>
    %c3_34 = arith.constant 3 : index
    %c0_35 = arith.constant 0 : index
    %c0_36 = arith.constant 0 : index
    %50 = vector.load %arg8[%c3_34, %c0_35, %c0_36] : memref<4x8x128xbf16, #tpu.memory_space<vmem>>, vector<1x8x128xbf16>
    %51 = vector.shape_cast %50 : vector<1x8x128xbf16> to vector<8x128xbf16>
    %52 = vector.shape_cast %49 : vector<8x128xbf16> to vector<1x8x128xbf16>
    tpu.vector_store %arg8[%c3_34, %c0_35, %c0_36], %52 {strides = array<i32>} : memref<4x8x128xbf16, #tpu.memory_space<vmem>>, vector<1x8x128xbf16>,
    %c0_37 = arith.constant 0 : index
    %c0_38 = arith.constant 0 : index
    %c0_39 = arith.constant 0 : index
    %53 = vector.load %arg6[%c0_37, %c0_38, %c0_39] : memref<4x8x128xbf16, #tpu.memory_space<vmem>>, vector<4x8x128xbf16>
    %c0_40 = arith.constant 0 : index
    %c0_41 = arith.constant 0 : index
    %c0_42 = arith.constant 0 : index
    %54 = vector.load %arg7[%c0_40, %c0_41, %c0_42] : memref<4x8x128xbf16, #tpu.memory_space<vmem>>, vector<4x8x128xbf16>
    "tpu.trace_start"() <{level = 10 : i32, message = "gqd,gkd->gqk"}> : () -> ()
    %cst_43 = arith.constant dense<0.000000e+00> : vector<4x8x8xf32>
    %55 = tpu.matmul %53, %54, %cst_43 {dimension_numbers = #tpu.dot_dimension_numbers<[2], [2], [1], [1], [0, 0, 0, 1, 1, 1], [0], [0]>} : vector<4x8x128xbf16>, vector<4x8x128xbf16>, vector<4x8x8xf32> -> vector<4x8x8xf32>
    "tpu.trace_stop"() : () -> ()
    %cst_44 = arith.constant dense<0xFF800000> : vector<4x8xf32>
    %56 = vector.multi_reduction <maximumf>, %55, %cst_44 [2] : vector<4x8x8xf32> to vector<4x8xf32>
    %57 = vector.shape_cast %56 : vector<4x8xf32> to vector<4x8x1xf32>
    %58 = vector.broadcast %57 : vector<4x8x1xf32> to vector<4x8x8xf32>
    %59 = arith.subf %55, %58 : vector<4x8x8xf32>
    %60 = math.exp %59 : vector<4x8x8xf32>
    %cst_45 = arith.constant dense<0.000000e+00> : vector<4x8xf32>
    %61 = vector.multi_reduction <add>, %60, %cst_45 [2] : vector<4x8x8xf32> to vector<4x8xf32>
    %62 = vector.shape_cast %61 : vector<4x8xf32> to vector<4x8x1xf32>
    %63 = tpu.reciprocal %62 {approx = true} : vector<4x8x1xf32> -> vector<4x8x1xf32>
    %64 = vector.broadcast %63 : vector<4x8x1xf32> to vector<4x8x8xf32>
    %65 = arith.mulf %60, %64 : vector<4x8x8xf32>
    %66 = arith.truncf %65 : vector<4x8x8xf32> to vector<4x8x8xbf16>
    %c0_46 = arith.constant 0 : index
    %c0_47 = arith.constant 0 : index
    %c0_48 = arith.constant 0 : index
    %67 = vector.load %arg8[%c0_46, %c0_47, %c0_48] : memref<4x8x128xbf16, #tpu.memory_space<vmem>>, vector<4x8x128xbf16>
    "tpu.trace_start"() <{level = 10 : i32, message = "gqk,gkd->gqd"}> : () -> ()
    %cst_49 = arith.constant dense<0.000000e+00> : vector<4x8x128xf32>
    %68 = tpu.matmul %66, %67, %cst_49 {dimension_numbers = #tpu.dot_dimension_numbers<[2], [1], [1], [2], [0, 0, 0, 1, 1, 2], [0], [0]>} : vector<4x8x8xbf16>, vector<4x8x128xbf16>, vector<4x8x128xf32> -> vector<4x8x128xf32>
    "tpu.trace_stop"() : () -> ()
    %69 = arith.truncf %68 : vector<4x8x128xf32> to vector<4x8x128xbf16>
    %70 = vector.extract_strided_slice %69 {offsets = [0, 0, 0], sizes = [1, 8, 128], strides = [1, 1, 1]} : vector<4x8x128xbf16> to vector<1x8x128xbf16>
    %71 = vector.shape_cast %70 : vector<1x8x128xbf16> to vector<8x128xbf16>
    %c0_50 = arith.constant 0 : index
    %c0_51 = arith.constant 0 : index
    %72 = vector.load %arg9[%c0_50, %c0_51] : memref<8x512xbf16, #tpu.memory_space<vmem>>, vector<8x128xbf16>
    tpu.vector_store %arg9[%c0_50, %c0_51], %71 {strides = array<i32>} : memref<8x512xbf16, #tpu.memory_space<vmem>>, vector<8x128xbf16>,
    %73 = vector.extract_strided_slice %69 {offsets = [1, 0, 0], sizes = [1, 8, 128], strides = [1, 1, 1]} : vector<4x8x128xbf16> to vector<1x8x128xbf16>
    %74 = vector.shape_cast %73 : vector<1x8x128xbf16> to vector<8x128xbf16>
    %c0_52 = arith.constant 0 : index
    %c128 = arith.constant 128 : index
    %75 = vector.load %arg9[%c0_52, %c128] : memref<8x512xbf16, #tpu.memory_space<vmem>>, vector<8x128xbf16>
    tpu.vector_store %arg9[%c0_52, %c128], %74 {strides = array<i32>} : memref<8x512xbf16, #tpu.memory_space<vmem>>, vector<8x128xbf16>,
    %76 = vector.extract_strided_slice %69 {offsets = [2, 0, 0], sizes = [1, 8, 128], strides = [1, 1, 1]} : vector<4x8x128xbf16> to vector<1x8x128xbf16>
    %77 = vector.shape_cast %76 : vector<1x8x128xbf16> to vector<8x128xbf16>
    %c0_53 = arith.constant 0 : index
    %c256 = arith.constant 256 : index
    %78 = vector.load %arg9[%c0_53, %c256] : memref<8x512xbf16, #tpu.memory_space<vmem>>, vector<8x128xbf16>
    tpu.vector_store %arg9[%c0_53, %c256], %77 {strides = array<i32>} : memref<8x512xbf16, #tpu.memory_space<vmem>>, vector<8x128xbf16>,
    %79 = vector.extract_strided_slice %69 {offsets = [3, 0, 0], sizes = [1, 8, 128], strides = [1, 1, 1]} : vector<4x8x128xbf16> to vector<1x8x128xbf16>
    %80 = vector.shape_cast %79 : vector<1x8x128xbf16> to vector<8x128xbf16>
    %c0_54 = arith.constant 0 : index
    %c384 = arith.constant 384 : index
    %81 = vector.load %arg9[%c0_54, %c384] : memref<8x512xbf16, #tpu.memory_space<vmem>>, vector<8x128xbf16>
    tpu.vector_store %arg9[%c0_54, %c384], %80 {strides = array<i32>} : memref<8x512xbf16, #tpu.memory_space<vmem>>, vector<8x128xbf16>,
    %c0_55 = arith.constant 0 : index
    %c0_56 = arith.constant 0 : index
    %82 = vector.load %arg9[%c0_55, %c0_56] : memref<8x512xbf16, #tpu.memory_space<vmem>>, vector<8x512xbf16>
    %c0_57 = arith.constant 0 : index
    %c0_58 = arith.constant 0 : index
    %83 = vector.load %arg3[%c0_57, %c0_58] : memref<512x128xbf16, #tpu.memory_space<vmem>>, vector<512x128xbf16>
    %cst_59 = arith.constant dense<0.000000e+00> : vector<8x128xf32>
    %84 = tpu.matmul %82, %83, %cst_59 {dimension_numbers = #tpu.dot_dimension_numbers<[1], [0], [0], [1], [0, 0, 1, 1], [], []>} : vector<8x512xbf16>, vector<512x128xbf16>, vector<8x128xf32> -> vector<8x128xf32>
    %c0_60 = arith.constant 0 : index
    %c0_61 = arith.constant 0 : index
    %85 = vector.load %arg4[%c0_60, %c0_61] : memref<1x128xf32, #tpu.memory_space<vmem>>, vector<1x128xf32>
    %86 = vector.broadcast %85 : vector<1x128xf32> to vector<8x128xf32>
    %87 = arith.addf %84, %86 : vector<8x128xf32>
    %88 = vector.shape_cast %87 : vector<8x128xf32> to vector<1x8x128xf32>
    %89 = arith.truncf %88 : vector<1x8x128xf32> to vector<1x8x128xbf16>
    %c0_62 = arith.constant 0 : index
    %c0_63 = arith.constant 0 : index
    %c0_64 = arith.constant 0 : index
    %90 = vector.load %arg5[%c0_62, %c0_63, %c0_64] : memref<1x8x128xbf16, #tpu.memory_space<vmem>>, vector<1x8x128xbf16>
    tpu.vector_store %arg5[%c0_62, %c0_63, %c0_64], %89 {strides = array<i32>} : memref<1x8x128xbf16, #tpu.memory_space<vmem>>, vector<1x8x128xbf16>,
    return
  }
  func.func @transform_0(%arg0: i32) -> (i32, i32, i32) {
    %c0_i32 = arith.constant 0 : i32
    %c0_i32_0 = arith.constant 0 : i32
    %c0_i32_1 = arith.constant 0 : i32
    return %arg0, %c0_i32, %c0_i32_0 : i32, i32, i32
  }
  func.func @transform_1(%arg0: i32) -> (i32, i32) {
    %c0_i32 = arith.constant 0 : i32
    %c0_i32_0 = arith.constant 0 : i32
    %c0_i32_1 = arith.constant 0 : i32
    return %c0_i32, %c0_i32_0 : i32, i32
  }
  func.func @transform_2(%arg0: i32) -> (i32, i32) {
    %c0_i32 = arith.constant 0 : i32
    %c0_i32_0 = arith.constant 0 : i32
    %c0_i32_1 = arith.constant 0 : i32
    return %c0_i32, %c0_i32_0 : i32, i32
  }
  func.func @transform_3(%arg0: i32) -> (i32, i32) {
    %c0_i32 = arith.constant 0 : i32
    %c0_i32_0 = arith.constant 0 : i32
    %c0_i32_1 = arith.constant 0 : i32
    return %c0_i32, %c0_i32_0 : i32, i32
  }
  func.func @transform_4(%arg0: i32) -> (i32, i32, i32) {
    %c0_i32 = arith.constant 0 : i32
    %c0_i32_0 = arith.constant 0 : i32
    %c0_i32_1 = arith.constant 0 : i32
    return %arg0, %c0_i32, %c0_i32_0 : i32, i32, i32
  }
}

</mosaic_0001>

<llo_original>
// kernel: tpu_custom_call.1
$region0: #{tpu_custom_call.1}
  #allocation0 [shape = 'u32[]', space=smem, size = 0x4, offset = 0x4, fixed_abs, tag = 'smem constant byte address 0x4 - core index']
  #allocation1 [shape = 'u32[144,128]{1,0:T(1,128)}', space=vmem, size = 0x12000, scoped, tag = 'internal scratch']
  #allocation2 [shape = 'bf16[4,8,128]{2,1,0:T(8,128)(2,1)}', space=vmem, size = 0x2000, scoped, tag = 'scratch operand']
  #allocation3 [shape = 'bf16[4,8,128]{2,1,0:T(8,128)(2,1)}', space=vmem, size = 0x2000, scoped, tag = 'scratch operand']
  #allocation4 [shape = 'bf16[4,8,128]{2,1,0:T(8,128)(2,1)}', space=vmem, size = 0x2000, scoped, tag = 'scratch operand']
  #allocation5 [shape = 'bf16[8,512]{1,0:T(8,128)(2,1)}', space=vmem, size = 0x2000, scoped, tag = 'scratch operand']
  %s0 = inlined_call_operand.hbm [shape: bf16[2,8,128], index: 0, kind: input, shape index: {}]
  %s1 = inlined_call_operand.hbm [shape: bf16[128,1536], index: 1, kind: input, shape index: {}]
  %s2 = inlined_call_operand.hbm [shape: bf16[512,128], index: 2, kind: input, shape index: {}]
  %s3 = inlined_call_operand.vmem [shape: f32[1,128], index: 3, kind: input, shape index: {}]
  %s4 = inlined_call_operand.hbm [shape: bf16[2,8,128], index: 4, kind: output, shape index: {}]
  %s5 = sld [smem:[#allocation0]]
  $region61: #{tpu_custom_call.1} parent=0
    _
  %s7 = ssub.s32 1, %s5
  %s8 = scalar_select 0, %s7, %s5
  $region1: #{tpu_custom_call.1} parent=0
    #allocation6 [shape = 'u8[4096]{0}', space=vmem, size = 0x1000, scoped, tag = 'input window, operand 0']
    #allocation7 [shape = 's32[2]{0}', space=sflag, size = 0x8, scoped, tag = 'scoped memory for tpu_custom_call.1']
    #allocation8 [shape = 's32[2]{0}', space=sflag, size = 0x8, scoped, tag = 'scoped memory for tpu_custom_call.1']
    #allocation9 [shape = 'u8[393216]{0}', space=vmem, size = 0x60000, scoped, tag = 'input window, operand 1, single buffered']
    #allocation10 [shape = 's32[1]{0}', space=sflag, size = 0x4, scoped, tag = 'scoped memory for tpu_custom_call.1']
    #allocation11 [shape = 'u8[131072]{0}', space=vmem, size = 0x20000, scoped, tag = 'input window, operand 2, single buffered']
    #allocation12 [shape = 'u8[4096]{0}', space=vmem, size = 0x1000, scoped, tag = 'output window, operand 0']
    %9 = vsyncpa [#allocation7], 0
    %s10 = scalar_lea.sflag [#allocation7], 1
    %11 = vsyncpa %s10, 0
    %12 = vsyncpa [#allocation10], 0
    %13 = vsyncpa [#allocation8], 0
    %s14 = scalar_lea.sflag [#allocation8], 1
    %15 = vsyncpa %s14, 0
    loop: start=0, step=1, limit=4
    $region2: #{tpu_custom_call.1} parent=1 // loop_pre_header
      _
    $region3: #{tpu_custom_call.1} parent=1 // loop_header
      %s17 = sphi 0, %s21
      %p18 = scmp.ge.s32.totalorder %s17, 4
      %s27 = sphi 0, %s29
      %s30 = sphi 0, %s27
      %s31 = sphi 0, %s30
      %s47 = sphi 0, %s31
      %s51 = sphi 0, %s51
      %s53 = sphi 0, %s51
      %s54 = sphi 0, %s53
      %s68 = sphi 0, %s54
      %s72 = sphi 0, %s72
      %s74 = sphi 0, %s72
      %s75 = sphi 0, %s74
      %s89 = sphi 0, %s75
      %s93 = sphi 0, %s93
      %s95 = sphi 0, %s93
      %s96 = sphi 0, %s95
      %s110 = sphi 0, %s96
      %s116 = sphi 0, %s118
      %s119 = sphi 0, %s116
      %s120 = sphi 0, %s119
      %s136 = sphi 0, %s120
    $region4: #{tpu_custom_call.1} parent=1 // loop_header_branch
      %20 = sbr.rel (%p18) target = $region8
    $region5: #{tpu_custom_call.1} parent=1 // loop_body
      %s22 = ssub.s32 %s17, 1
      %s23 = ssub.s32 %s17, 2
      %s24 = sadd.s32 %s17, 1
      %s25 = ssub.s32 %s17, %s24
      %p26 = scmp.eq.s32.totalorder %s25, 0
      %s28 = sadd.s32 %s27, 1
      %s29 = scalar_select %p26, %s27, %s28
      %p32 = pneg %p26
      %p33 = scmp.eq.s32.totalorder %s17, 1
      %p34 = por %p32, %p33
      %p35 = scmp.ne.s32.totalorder %s27, %s30
      %p36 = scmp.eq.s32.totalorder %s17, 0
      %p37 = por %p35, %p36
      %p38 = scmp.ne.s32.totalorder %s27, %s30
      %p39 = scmp.eq.s32.totalorder %s22, 1
      %p40 = por %p38, %p39
      %p41 = scmp.ne.s32.totalorder %s30, %s31
      %p42 = scmp.eq.s32.totalorder %s22, 0
      %p43 = por %p41, %p42
      %p44 = scmp.ne.s32.totalorder %s30, %s31
      %p45 = scmp.eq.s32.totalorder %s23, 1
      %p46 = por %p44, %p45
      %p48 = scmp.ne.s32.totalorder %s31, %s47
      %p49 = scmp.eq.s32.totalorder %s23, 0
      %p50 = por %p48, %p49
      %s52 = sadd.s32 %s51, 1
      %p55 = scmp.eq.s32.totalorder %s17, 1
      %p56 = scmp.ne.s32.totalorder %s51, %s53
      %p57 = scmp.eq.s32.totalorder %s17, 0
      %p58 = por %p56, %p57
      %p59 = scmp.ne.s32.totalorder %s51, %s53
      %p60 = scmp.eq.s32.totalorder %s22, 1
      %p61 = por %p59, %p60
      %p62 = scmp.ne.s32.totalorder %s53, %s54
      %p63 = scmp.eq.s32.totalorder %s22, 0
      %p64 = por %p62, %p63
      %p65 = scmp.ne.s32.totalorder %s53, %s54
      %p66 = scmp.eq.s32.totalorder %s23, 1
      %p67 = por %p65, %p66
      %p69 = scmp.ne.s32.totalorder %s54, %s68
      %p70 = scmp.eq.s32.totalorder %s23, 0
      %p71 = por %p69, %p70
      %s73 = sadd.s32 %s72, 1
      %p76 = scmp.eq.s32.totalorder %s17, 1
      %p77 = scmp.ne.s32.totalorder %s72, %s74
      %p78 = scmp.eq.s32.totalorder %s17, 0
      %p79 = por %p77, %p78
      %p80 = scmp.ne.s32.totalorder %s72, %s74
      %p81 = scmp.eq.s32.totalorder %s22, 1
      %p82 = por %p80, %p81
      %p83 = scmp.ne.s32.totalorder %s74, %s75
      %p84 = scmp.eq.s32.totalorder %s22, 0
      %p85 = por %p83, %p84
      %p86 = scmp.ne.s32.totalorder %s74, %s75
      %p87 = scmp.eq.s32.totalorder %s23, 1
      %p88 = por %p86, %p87
      %p90 = scmp.ne.s32.totalorder %s75, %s89
      %p91 = scmp.eq.s32.totalorder %s23, 0
      %p92 = por %p90, %p91
      %s94 = sadd.s32 %s93, 1
      %p97 = scmp.eq.s32.totalorder %s17, 1
      %p98 = scmp.ne.s32.totalorder %s93, %s95
      %p99 = scmp.eq.s32.totalorder %s17, 0
      %p100 = por %p98, %p99
      %p101 = scmp.ne.s32.totalorder %s93, %s95
      %p102 = scmp.eq.s32.totalorder %s22, 1
      %p103 = por %p101, %p102
      %p104 = scmp.ne.s32.totalorder %s95, %s96
      %p105 = scmp.eq.s32.totalorder %s22, 0
      %p106 = por %p104, %p105
      %p107 = scmp.ne.s32.totalorder %s95, %s96
      %p108 = scmp.eq.s32.totalorder %s23, 1
      %p109 = por %p107, %p108
      %p111 = scmp.ne.s32.totalorder %s96, %s110
      %p112 = scmp.eq.s32.totalorder %s23, 0
      %p113 = por %p111, %p112
      %s114 = ssub.s32 %s17, %s24
      %p115 = scmp.eq.s32.totalorder %s114, 0
      %s117 = sadd.s32 %s116, 1
      %s118 = scalar_select %p115, %s116, %s117
      %p121 = pneg %p115
      %p122 = scmp.eq.s32.totalorder %s17, 1
      %p123 = por %p121, %p122
      %p124 = scmp.ne.s32.totalorder %s116, %s119
      %p125 = scmp.eq.s32.totalorder %s17, 0
      %p126 = por %p124, %p125
      %p127 = scmp.ne.s32.totalorder %s116, %s119
      %p128 = scmp.eq.s32.totalorder %s22, 1
      %p129 = por %p127, %p128
      %p130 = scmp.ne.s32.totalorder %s119, %s120
      %p131 = scmp.eq.s32.totalorder %s22, 0
      %p132 = por %p130, %p131
      %p133 = scmp.ne.s32.totalorder %s119, %s120
      %p134 = scmp.eq.s32.totalorder %s23, 1
      %p135 = por %p133, %p134
      %p137 = scmp.ne.s32.totalorder %s120, %s136
      %p138 = scmp.eq.s32.totalorder %s23, 0
      %p139 = por %p137, %p138
      %p140 = scmp.le.s32.totalorder 1, %s17
      %p141 = scmp.lt.s32.totalorder %s17, 3
      %p142 = pnand %p140, %p141
      %p143 = pneg %p142
      // Predicated region
      $region9: #{tpu_custom_call.1} parent=5 // pred_check
        _
      $region10: #{tpu_custom_call.1} parent=5 // pred_check_branch
        %145 = sbr.rel (%p142) target = $region12
      $region11: #{tpu_custom_call.1} parent=5 // pred_region
        %s146 = ssub.s32 %s17, 1
        // Predicated region
        $region13: #{tpu_custom_call.1} parent=11 // pred_check
          %p147 = pneg %p64
        $region14: #{tpu_custom_call.1} parent=11 // pred_check_branch
          %149 = sbr.rel (%p147) target = $region16
        $region15: #{tpu_custom_call.1} parent=11 // pred_region
          %s151 = ssub.s32 12288, 12288
          %152 = vsyncadd [#allocation10], %s151
          %s153 = sshll.u32 [#allocation9], 4
          %s154 = int_to_ptr.vmem [resolvable:$true] %s153
          %159 = dma.hbm_to_vmem [thread:$0]  %s1, 12288, %s154, [#allocation10], 768, 768, 48
        $region16: #{tpu_custom_call.1} parent=11 // pred_fallthru
          _
        // Predicated region
        $region17: #{tpu_custom_call.1} parent=11 // pred_check
          %p160 = pneg %p85
        $region18: #{tpu_custom_call.1} parent=11 // pred_check_branch
          %162 = sbr.rel (%p160) target = $region20
        $region19: #{tpu_custom_call.1} parent=11 // pred_region
          %s164 = ssub.s32 4096, 4096
          %165 = vsyncadd [#allocation10], %s164
          %s166 = sshll.u32 [#allocation11], 4
          %s167 = int_to_ptr.vmem [resolvable:$true] %s166
          %172 = dma.hbm_to_vmem [thread:$0]  %s2, 4096, %s167, [#allocation10], 64, 64, 4
        $region20: #{tpu_custom_call.1} parent=11 // pred_fallthru
          _
        // Predicated region
        $region21: #{tpu_custom_call.1} parent=11 // pred_check
          %p173 = pneg %p106
        $region22: #{tpu_custom_call.1} parent=11 // pred_check_branch
          %175 = sbr.rel (%p173) target = $region24
        $region23: #{tpu_custom_call.1} parent=11 // pred_region
          _
        $region24: #{tpu_custom_call.1} parent=11 // pred_fallthru
          _
      $region12: #{tpu_custom_call.1} parent=5 // pred_fallthru
        _
      %p176 = scmp.lt.s32.totalorder %s17, 2
      // Predicated region
      $region25: #{tpu_custom_call.1} parent=5 // pred_check
        %p177 = pneg %p176
      $region26: #{tpu_custom_call.1} parent=5 // pred_check_branch
        %179 = sbr.rel (%p177) target = $region28
      $region27: #{tpu_custom_call.1} parent=5 // pred_region
        // Predicated region
        $region29: #{tpu_custom_call.1} parent=27 // pred_check
          %p180 = pneg %p37
        $region30: #{tpu_custom_call.1} parent=27 // pred_check_branch
          %182 = sbr.rel (%p180) target = $region32
        $region31: #{tpu_custom_call.1} parent=27 // pred_region
          %s183 = sand.u32 %s27, 1
          %s184 = scalar_lea.sflag [#allocation7], %s183
          %s185 = sand.u32 %s27, 1
          %s186 = smul.addr %s185, 4
          %s187 = scalar_lea.vmem [#allocation6], %s186
          %s189 = ssub.s32 64, 64
          %190 = vsyncadd %s184, %s189
          %s191 = smul.addr %s17, 64
          %s192 = scalar_lea.hbm %s0, %s191
          %s194 = sshll.u32 %s187, 4
          %s195 = int_to_ptr.vmem [resolvable:$true] %s194
          %197 = dma.hbm_to_vmem [thread:$0]  %s192, 64, %s195, %s184
        $region32: #{tpu_custom_call.1} parent=27 // pred_fallthru
          _
      $region28: #{tpu_custom_call.1} parent=5 // pred_fallthru
        _
      %p198 = scmp.le.s32.totalorder 1, %s17
      %p199 = scmp.lt.s32.totalorder %s17, 3
      %p200 = pnand %p198, %p199
      %p201 = pneg %p200
      // Predicated region
      $region33: #{tpu_custom_call.1} parent=5 // pred_check
        _
      $region34: #{tpu_custom_call.1} parent=5 // pred_check_branch
        %203 = sbr.rel (%p200) target = $region36
      $region35: #{tpu_custom_call.1} parent=5 // pred_region
        %s204 = ssub.s32 %s17, 1
        %s205 = sand.u32 %s30, 1
        %s206 = scalar_lea.sflag [#allocation7], %s205
        %s207 = sand.u32 %s30, 1
        %s208 = smul.addr %s207, 4
        %s209 = scalar_lea.vmem [#allocation6], %s208
        // Predicated region
        $region37: #{tpu_custom_call.1} parent=35 // pred_check
          %p210 = pneg %p43
        $region38: #{tpu_custom_call.1} parent=35 // pred_check_branch
          %212 = sbr.rel (%p210) target = $region40
        $region39: #{tpu_custom_call.1} parent=35 // pred_region
          %213 = dma.done %s206, 64
        $region40: #{tpu_custom_call.1} parent=35 // pred_fallthru
          _
        // Predicated region
        $region41: #{tpu_custom_call.1} parent=35 // pred_check
          %p214 = pneg %p64
        $region42: #{tpu_custom_call.1} parent=35 // pred_check_branch
          %216 = sbr.rel (%p214) target = $region44
        $region43: #{tpu_custom_call.1} parent=35 // pred_region
          %217 = dma.done [#allocation10], 12288
        $region44: #{tpu_custom_call.1} parent=35 // pred_fallthru
          _
        // Predicated region
        $region45: #{tpu_custom_call.1} parent=35 // pred_check
          %p218 = pneg %p85
        $region46: #{tpu_custom_call.1} parent=35 // pred_check_branch
          %220 = sbr.rel (%p218) target = $region48
        $region47: #{tpu_custom_call.1} parent=35 // pred_region
          %221 = dma.done [#allocation10], 4096
        $region48: #{tpu_custom_call.1} parent=35 // pred_fallthru
          _
        %s222 = sand.u32 %s30, 1
        %s223 = scalar_lea.sflag [#allocation7], %s222
        %s224 = sand.u32 %s30, 1
        %s225 = smul.addr %s224, 4
        %s226 = scalar_lea.vmem [#allocation6], %s225
        %p227 = pneg %p43
        %p228 = pneg %p40
        %p229 = pneg %p64
        %p230 = pneg %p61
        %p231 = pneg %p85
        %p232 = pneg %p82
        %p233 = pneg %p106
        %p234 = pneg %p103
        %p235 = pneg %p132
        %p236 = pneg %p129
        %s237 = sand.u32 %s119, 1
        %s238 = scalar_lea.sflag [#allocation8], %s237
        %s239 = sand.u32 %s119, 1
        %s240 = smul.addr %s239, 4
        %s241 = scalar_lea.vmem [#allocation12], %s240
        %v243 = vld [vmem:[%s209] sm:$0xf]
        %v244 = vld [vmem:[#allocation9] sm:$0xff]
        %v245 = vld [vmem:[#allocation9 + $0x8] sm:$0xff]
        %v246 = vld [vmem:[#allocation9 + $0x10] sm:$0xff]
        %v247 = vld [vmem:[#allocation9 + $0x18] sm:$0xff]
        %v248 = vld [vmem:[#allocation9 + $0x20] sm:$0xff]
        %v249 = vld [vmem:[#allocation9 + $0x28] sm:$0xff]
        %v250 = vld [vmem:[#allocation9 + $0x30] sm:$0xff]
        %v251 = vld [vmem:[#allocation9 + $0x38] sm:$0xff]
        %v252 = vld [vmem:[#allocation9 + $0x40] sm:$0xff]
        %v253 = vld [vmem:[#allocation9 + $0x48] sm:$0xff]
        %v254 = vld [vmem:[#allocation9 + $0x50] sm:$0xff]
        %v255 = vld [vmem:[#allocation9 + $0x58] sm:$0xff]
        %v256 = vld [vmem:[#allocation9 + $0x60] sm:$0xff]
        %v257 = vld [vmem:[#allocation9 + $0x68] sm:$0xff]
        %v258 = vld [vmem:[#allocation9 + $0x70] sm:$0xff]
        %v259 = vld [vmem:[#allocation9 + $0x78] sm:$0xff]
        %v260 = vld [vmem:[#allocation9 + $0x80] sm:$0xff]
        %v261 = vld [vmem:[#allocation9 + $0x88] sm:$0xff]
        %v262 = vld [vmem:[#allocation9 + $0x90] sm:$0xff]
        %v263 = vld [vmem:[#allocation9 + $0x98] sm:$0xff]
        %v264 = vld [vmem:[#allocation9 + $0xa0] sm:$0xff]
        %v265 = vld [vmem:[#allocation9 + $0xa8] sm:$0xff]
        %v266 = vld [vmem:[#allocation9 + $0xb0] sm:$0xff]
        %v267 = vld [vmem:[#allocation9 + $0xb8] sm:$0xff]
        %v268 = vld [vmem:[#allocation9 + $0xc0] sm:$0xff]
        %v269 = vld [vmem:[#allocation9 + $0xc8] sm:$0xff]
        %v270 = vld [vmem:[#allocation9 + $0xd0] sm:$0xff]
        %v271 = vld [vmem:[#allocation9 + $0xd8] sm:$0xff]
        %v272 = vld [vmem:[#allocation9 + $0xe0] sm:$0xff]
        %v273 = vld [vmem:[#allocation9 + $0xe8] sm:$0xff]
        %v274 = vld [vmem:[#allocation9 + $0xf0] sm:$0xff]
        %v275 = vld [vmem:[#allocation9 + $0xf8] sm:$0xff]
        %v276 = vld [vmem:[#allocation9 + $0x100] sm:$0xff]
        %v277 = vld [vmem:[#allocation9 + $0x108] sm:$0xff]
        %v278 = vld [vmem:[#allocation9 + $0x110] sm:$0xff]
        %v279 = vld [vmem:[#allocation9 + $0x118] sm:$0xff]
        %v280 = vld [vmem:[#allocation9 + $0x120] sm:$0xff]
        %v281 = vld [vmem:[#allocation9 + $0x128] sm:$0xff]
        %v282 = vld [vmem:[#allocation9 + $0x130] sm:$0xff]
        %v283 = vld [vmem:[#allocation9 + $0x138] sm:$0xff]
        %v284 = vld [vmem:[#allocation9 + $0x140] sm:$0xff]
        %v285 = vld [vmem:[#allocation9 + $0x148] sm:$0xff]
        %v286 = vld [vmem:[#allocation9 + $0x150] sm:$0xff]
        %v287 = vld [vmem:[#allocation9 + $0x158] sm:$0xff]
        %v288 = vld [vmem:[#allocation9 + $0x160] sm:$0xff]
        %v289 = vld [vmem:[#allocation9 + $0x168] sm:$0xff]
        %v290 = vld [vmem:[#allocation9 + $0x170] sm:$0xff]
        %v291 = vld [vmem:[#allocation9 + $0x178] sm:$0xff]
        %v292 = vld [vmem:[#allocation9 + $0x180] sm:$0xff]
        %v293 = vld [vmem:[#allocation9 + $0x188] sm:$0xff]
        %v294 = vld [vmem:[#allocation9 + $0x190] sm:$0xff]
        %v295 = vld [vmem:[#allocation9 + $0x198] sm:$0xff]
        %v296 = vld [vmem:[#allocation9 + $0x1a0] sm:$0xff]
        %v297 = vld [vmem:[#allocation9 + $0x1a8] sm:$0xff]
        %v298 = vld [vmem:[#allocation9 + $0x1b0] sm:$0xff]
        %v299 = vld [vmem:[#allocation9 + $0x1b8] sm:$0xff]
        %v300 = vld [vmem:[#allocation9 + $0x1c0] sm:$0xff]
        %v301 = vld [vmem:[#allocation9 + $0x1c8] sm:$0xff]
        %v302 = vld [vmem:[#allocation9 + $0x1d0] sm:$0xff]
        %v303 = vld [vmem:[#allocation9 + $0x1d8] sm:$0xff]
        %v304 = vld [vmem:[#allocation9 + $0x1e0] sm:$0xff]
        %v305 = vld [vmem:[#allocation9 + $0x1e8] sm:$0xff]
        %v306 = vld [vmem:[#allocation9 + $0x1f0] sm:$0xff]
        %v307 = vld [vmem:[#allocation9 + $0x1f8] sm:$0xff]
        %v308 = vld [vmem:[#allocation9 + $0x200] sm:$0xff]
        %v309 = vld [vmem:[#allocation9 + $0x208] sm:$0xff]
        %v310 = vld [vmem:[#allocation9 + $0x210] sm:$0xff]
        %v311 = vld [vmem:[#allocation9 + $0x218] sm:$0xff]
        %v312 = vld [vmem:[#allocation9 + $0x220] sm:$0xff]
        %v313 = vld [vmem:[#allocation9 + $0x228] sm:$0xff]
        %v314 = vld [vmem:[#allocation9 + $0x230] sm:$0xff]
        %v315 = vld [vmem:[#allocation9 + $0x238] sm:$0xff]
        %v316 = vld [vmem:[#allocation9 + $0x240] sm:$0xff]
        %v317 = vld [vmem:[#allocation9 + $0x248] sm:$0xff]
        %v318 = vld [vmem:[#allocation9 + $0x250] sm:$0xff]
        %v319 = vld [vmem:[#allocation9 + $0x258] sm:$0xff]
        %v320 = vld [vmem:[#allocation9 + $0x260] sm:$0xff]
        %v321 = vld [vmem:[#allocation9 + $0x268] sm:$0xff]
        %v322 = vld [vmem:[#allocation9 + $0x270] sm:$0xff]
        %v323 = vld [vmem:[#allocation9 + $0x278] sm:$0xff]
        %v324 = vld [vmem:[#allocation9 + $0x280] sm:$0xff]
        %v325 = vld [vmem:[#allocation9 + $0x288] sm:$0xff]
        %v326 = vld [vmem:[#allocation9 + $0x290] sm:$0xff]
        %v327 = vld [vmem:[#allocation9 + $0x298] sm:$0xff]
        %v328 = vld [vmem:[#allocation9 + $0x2a0] sm:$0xff]
        %v329 = vld [vmem:[#allocation9 + $0x2a8] sm:$0xff]
        %v330 = vld [vmem:[#allocation9 + $0x2b0] sm:$0xff]
        %v331 = vld [vmem:[#allocation9 + $0x2b8] sm:$0xff]
        %v332 = vld [vmem:[#allocation9 + $0x2c0] sm:$0xff]
        %v333 = vld [vmem:[#allocation9 + $0x2c8] sm:$0xff]
        %v334 = vld [vmem:[#allocation9 + $0x2d0] sm:$0xff]
        %v335 = vld [vmem:[#allocation9 + $0x2d8] sm:$0xff]
        %v336 = vld [vmem:[#allocation9 + $0x2e0] sm:$0xff]
        %v337 = vld [vmem:[#allocation9 + $0x2e8] sm:$0xff]
        %v338 = vld [vmem:[#allocation9 + $0x2f0] sm:$0xff]
        %v339 = vld [vmem:[#allocation9 + $0x2f8] sm:$0xff]
        %v436 = vunpack.c.l.b16 %v244
        %v437 = vunpack.c.h.b16 %v244
        %v438 = vunpack.c.l.b16 %v245
        %v439 = vunpack.c.h.b16 %v245
        %v440 = vunpack.c.l.b16 %v246
        %v441 = vunpack.c.h.b16 %v246
        %v442 = vunpack.c.l.b16 %v247
        %v443 = vunpack.c.h.b16 %v247
        %v444 = vunpack.c.l.b16 %v248
        %v445 = vunpack.c.h.b16 %v248
        %v446 = vunpack.c.l.b16 %v249
        %v447 = vunpack.c.h.b16 %v249
        %v448 = vunpack.c.l.b16 %v250
        %v449 = vunpack.c.h.b16 %v250
        %v450 = vunpack.c.l.b16 %v251
        %v451 = vunpack.c.h.b16 %v251
        %v452 = vunpack.c.l.b16 %v252
        %v453 = vunpack.c.h.b16 %v252
        %v454 = vunpack.c.l.b16 %v253
        %v455 = vunpack.c.h.b16 %v253
        %v456 = vunpack.c.l.b16 %v254
        %v457 = vunpack.c.h.b16 %v254
        %v458 = vunpack.c.l.b16 %v255
        %v459 = vunpack.c.h.b16 %v255
        %v460 = vunpack.c.l.b16 %v256
        %v461 = vunpack.c.h.b16 %v256
        %v462 = vunpack.c.l.b16 %v257
        %v463 = vunpack.c.h.b16 %v257
        %v464 = vunpack.c.l.b16 %v258
        %v465 = vunpack.c.h.b16 %v258
        %v466 = vunpack.c.l.b16 %v259
        %v467 = vunpack.c.h.b16 %v259
        %v468 = vunpack.c.l.b16 %v260
        %v469 = vunpack.c.h.b16 %v260
        %v470 = vunpack.c.l.b16 %v261
        %v471 = vunpack.c.h.b16 %v261
        %v472 = vunpack.c.l.b16 %v262
        %v473 = vunpack.c.h.b16 %v262
        %v474 = vunpack.c.l.b16 %v263
        %v475 = vunpack.c.h.b16 %v263
        %v476 = vunpack.c.l.b16 %v264
        %v477 = vunpack.c.h.b16 %v264
        %v478 = vunpack.c.l.b16 %v265
        %v479 = vunpack.c.h.b16 %v265
        %v480 = vunpack.c.l.b16 %v266
        %v481 = vunpack.c.h.b16 %v266
        %v482 = vunpack.c.l.b16 %v267
        %v483 = vunpack.c.h.b16 %v267
        %v484 = vunpack.c.l.b16 %v268
        %v485 = vunpack.c.h.b16 %v268
        %v486 = vunpack.c.l.b16 %v269
        %v487 = vunpack.c.h.b16 %v269
        %v488 = vunpack.c.l.b16 %v270
        %v489 = vunpack.c.h.b16 %v270
        %v490 = vunpack.c.l.b16 %v271
        %v491 = vunpack.c.h.b16 %v271
        %v492 = vunpack.c.l.b16 %v272
        %v493 = vunpack.c.h.b16 %v272
        %v494 = vunpack.c.l.b16 %v273
        %v495 = vunpack.c.h.b16 %v273
        %v496 = vunpack.c.l.b16 %v274
        %v497 = vunpack.c.h.b16 %v274
        %v498 = vunpack.c.l.b16 %v275
        %v499 = vunpack.c.h.b16 %v275
        %v500 = vunpack.c.l.b16 %v276
        %v501 = vunpack.c.h.b16 %v276
        %v502 = vunpack.c.l.b16 %v277
        %v503 = vunpack.c.h.b16 %v277
        %v504 = vunpack.c.l.b16 %v278
        %v505 = vunpack.c.h.b16 %v278
        %v506 = vunpack.c.l.b16 %v279
        %v507 = vunpack.c.h.b16 %v279
        %v508 = vunpack.c.l.b16 %v280
        %v509 = vunpack.c.h.b16 %v280
        %v510 = vunpack.c.l.b16 %v281
        %v511 = vunpack.c.h.b16 %v281
        %v512 = vunpack.c.l.b16 %v282
        %v513 = vunpack.c.h.b16 %v282
        %v514 = vunpack.c.l.b16 %v283
        %v515 = vunpack.c.h.b16 %v283
        %v516 = vunpack.c.l.b16 %v284
        %v517 = vunpack.c.h.b16 %v284
        %v518 = vunpack.c.l.b16 %v285
        %v519 = vunpack.c.h.b16 %v285
        %v520 = vunpack.c.l.b16 %v286
        %v521 = vunpack.c.h.b16 %v286
        %v522 = vunpack.c.l.b16 %v287
        %v523 = vunpack.c.h.b16 %v287
        %v524 = vunpack.c.l.b16 %v288
        %v525 = vunpack.c.h.b16 %v288
        %v526 = vunpack.c.l.b16 %v289
        %v527 = vunpack.c.h.b16 %v289
        %v528 = vunpack.c.l.b16 %v290
        %v529 = vunpack.c.h.b16 %v290
        %v530 = vunpack.c.l.b16 %v291
        %v531 = vunpack.c.h.b16 %v291
        %v532 = vunpack.c.l.b16 %v292
        %v533 = vunpack.c.h.b16 %v292
        %v534 = vunpack.c.l.b16 %v293
        %v535 = vunpack.c.h.b16 %v293
        %v536 = vunpack.c.l.b16 %v294
        %v537 = vunpack.c.h.b16 %v294
        %v538 = vunpack.c.l.b16 %v295
        %v539 = vunpack.c.h.b16 %v295
        %v540 = vunpack.c.l.b16 %v296
        %v541 = vunpack.c.h.b16 %v296
        %v542 = vunpack.c.l.b16 %v297
        %v543 = vunpack.c.h.b16 %v297
        %v544 = vunpack.c.l.b16 %v298
        %v545 = vunpack.c.h.b16 %v298
        %v546 = vunpack.c.l.b16 %v299
        %v547 = vunpack.c.h.b16 %v299
        %v548 = vunpack.c.l.b16 %v300
        %v549 = vunpack.c.h.b16 %v300
        %v550 = vunpack.c.l.b16 %v301
        %v551 = vunpack.c.h.b16 %v301
        %v552 = vunpack.c.l.b16 %v302
        %v553 = vunpack.c.h.b16 %v302
        %v554 = vunpack.c.l.b16 %v303
        %v555 = vunpack.c.h.b16 %v303
        %v556 = vunpack.c.l.b16 %v304
        %v557 = vunpack.c.h.b16 %v304
        %v558 = vunpack.c.l.b16 %v305
        %v559 = vunpack.c.h.b16 %v305
        %v560 = vunpack.c.l.b16 %v306
        %v561 = vunpack.c.h.b16 %v306
        %v562 = vunpack.c.l.b16 %v307
        %v563 = vunpack.c.h.b16 %v307
        %v564 = vunpack.c.l.b16 %v308
        %v565 = vunpack.c.h.b16 %v308
        %v566 = vunpack.c.l.b16 %v309
        %v567 = vunpack.c.h.b16 %v309
        %v568 = vunpack.c.l.b16 %v310
        %v569 = vunpack.c.h.b16 %v310
        %v570 = vunpack.c.l.b16 %v311
        %v571 = vunpack.c.h.b16 %v311
        %v572 = vunpack.c.l.b16 %v312
        %v573 = vunpack.c.h.b16 %v312
        %v574 = vunpack.c.l.b16 %v313
        %v575 = vunpack.c.h.b16 %v313
        %v576 = vunpack.c.l.b16 %v314
        %v577 = vunpack.c.h.b16 %v314
        %v578 = vunpack.c.l.b16 %v315
        %v579 = vunpack.c.h.b16 %v315
        %v580 = vunpack.c.l.b16 %v316
        %v581 = vunpack.c.h.b16 %v316
        %v582 = vunpack.c.l.b16 %v317
        %v583 = vunpack.c.h.b16 %v317
        %v584 = vunpack.c.l.b16 %v318
        %v585 = vunpack.c.h.b16 %v318
        %v586 = vunpack.c.l.b16 %v319
        %v587 = vunpack.c.h.b16 %v319
        %v588 = vunpack.c.l.b16 %v320
        %v589 = vunpack.c.h.b16 %v320
        %v590 = vunpack.c.l.b16 %v321
        %v591 = vunpack.c.h.b16 %v321
        %v592 = vunpack.c.l.b16 %v322
        %v593 = vunpack.c.h.b16 %v322
        %v594 = vunpack.c.l.b16 %v323
        %v595 = vunpack.c.h.b16 %v323
        %v596 = vunpack.c.l.b16 %v324
        %v597 = vunpack.c.h.b16 %v324
        %v598 = vunpack.c.l.b16 %v325
        %v599 = vunpack.c.h.b16 %v325
        %v600 = vunpack.c.l.b16 %v326
        %v601 = vunpack.c.h.b16 %v326
        %v602 = vunpack.c.l.b16 %v327
        %v603 = vunpack.c.h.b16 %v327
        %v604 = vunpack.c.l.b16 %v328
        %v605 = vunpack.c.h.b16 %v328
        %v606 = vunpack.c.l.b16 %v329
        %v607 = vunpack.c.h.b16 %v329
        %v608 = vunpack.c.l.b16 %v330
        %v609 = vunpack.c.h.b16 %v330
        %v610 = vunpack.c.l.b16 %v331
        %v611 = vunpack.c.h.b16 %v331
        %v612 = vunpack.c.l.b16 %v332
        %v613 = vunpack.c.h.b16 %v332
        %v614 = vunpack.c.l.b16 %v333
        %v615 = vunpack.c.h.b16 %v333
        %v616 = vunpack.c.l.b16 %v334
        %v617 = vunpack.c.h.b16 %v334
        %v618 = vunpack.c.l.b16 %v335
        %v619 = vunpack.c.h.b16 %v335
        %v620 = vunpack.c.l.b16 %v336
        %v621 = vunpack.c.h.b16 %v336
        %v622 = vunpack.c.l.b16 %v337
        %v623 = vunpack.c.h.b16 %v337
        %v624 = vunpack.c.l.b16 %v338
        %v625 = vunpack.c.h.b16 %v338
        %v626 = vunpack.c.l.b16 %v339
        %v627 = vunpack.c.h.b16 %v339
        %v628 = vpack.c.b16 %v448, %v436
        %v629 = vpack.c.b16 %v449, %v437
        %v630 = vpack.c.b16 %v450, %v438
        %v631 = vpack.c.b16 %v451, %v439
        %v632 = vpack.c.b16 %v452, %v440
        %v633 = vpack.c.b16 %v453, %v441
        %v634 = vpack.c.b16 %v454, %v442
        %v635 = vpack.c.b16 %v455, %v443
        %v636 = vpack.c.b16 %v456, %v444
        %v637 = vpack.c.b16 %v457, %v445
        %v638 = vpack.c.b16 %v458, %v446
        %v639 = vpack.c.b16 %v459, %v447
        %v640 = vpack.c.b16 %v472, %v460
        %v641 = vpack.c.b16 %v473, %v461
        %v642 = vpack.c.b16 %v474, %v462
        %v643 = vpack.c.b16 %v475, %v463
        %v644 = vpack.c.b16 %v476, %v464
        %v645 = vpack.c.b16 %v477, %v465
        %v646 = vpack.c.b16 %v478, %v466
        %v647 = vpack.c.b16 %v479, %v467
        %v648 = vpack.c.b16 %v480, %v468
        %v649 = vpack.c.b16 %v481, %v469
        %v650 = vpack.c.b16 %v482, %v470
        %v651 = vpack.c.b16 %v483, %v471
        %v652 = vpack.c.b16 %v496, %v484
        %v653 = vpack.c.b16 %v497, %v485
        %v654 = vpack.c.b16 %v498, %v486
        %v655 = vpack.c.b16 %v499, %v487
        %v656 = vpack.c.b16 %v500, %v488
        %v657 = vpack.c.b16 %v501, %v489
        %v658 = vpack.c.b16 %v502, %v490
        %v659 = vpack.c.b16 %v503, %v491
        %v660 = vpack.c.b16 %v504, %v492
        %v661 = vpack.c.b16 %v505, %v493
        %v662 = vpack.c.b16 %v506, %v494
        %v663 = vpack.c.b16 %v507, %v495
        %v664 = vpack.c.b16 %v520, %v508
        %v665 = vpack.c.b16 %v521, %v509
        %v666 = vpack.c.b16 %v522, %v510
        %v667 = vpack.c.b16 %v523, %v511
        %v668 = vpack.c.b16 %v524, %v512
        %v669 = vpack.c.b16 %v525, %v513
        %v670 = vpack.c.b16 %v526, %v514
        %v671 = vpack.c.b16 %v527, %v515
        %v672 = vpack.c.b16 %v528, %v516
        %v673 = vpack.c.b16 %v529, %v517
        %v674 = vpack.c.b16 %v530, %v518
        %v675 = vpack.c.b16 %v531, %v519
        %v676 = vpack.c.b16 %v544, %v532
        %v677 = vpack.c.b16 %v545, %v533
        %v678 = vpack.c.b16 %v546, %v534
        %v679 = vpack.c.b16 %v547, %v535
        %v680 = vpack.c.b16 %v548, %v536
        %v681 = vpack.c.b16 %v549, %v537
        %v682 = vpack.c.b16 %v550, %v538
        %v683 = vpack.c.b16 %v551, %v539
        %v684 = vpack.c.b16 %v552, %v540
        %v685 = vpack.c.b16 %v553, %v541
        %v686 = vpack.c.b16 %v554, %v542
        %v687 = vpack.c.b16 %v555, %v543
        %v688 = vpack.c.b16 %v568, %v556
        %v689 = vpack.c.b16 %v569, %v557
        %v690 = vpack.c.b16 %v570, %v558
        %v691 = vpack.c.b16 %v571, %v559
        %v692 = vpack.c.b16 %v572, %v560
        %v693 = vpack.c.b16 %v573, %v561
        %v694 = vpack.c.b16 %v574, %v562
        %v695 = vpack.c.b16 %v575, %v563
        %v696 = vpack.c.b16 %v576, %v564
        %v697 = vpack.c.b16 %v577, %v565
        %v698 = vpack.c.b16 %v578, %v566
        %v699 = vpack.c.b16 %v579, %v567
        %v700 = vpack.c.b16 %v592, %v580
        %v701 = vpack.c.b16 %v593, %v581
        %v702 = vpack.c.b16 %v594, %v582
        %v703 = vpack.c.b16 %v595, %v583
        %v704 = vpack.c.b16 %v596, %v584
        %v705 = vpack.c.b16 %v597, %v585
        %v706 = vpack.c.b16 %v598, %v586
        %v707 = vpack.c.b16 %v599, %v587
        %v708 = vpack.c.b16 %v600, %v588
        %v709 = vpack.c.b16 %v601, %v589
        %v710 = vpack.c.b16 %v602, %v590
        %v711 = vpack.c.b16 %v603, %v591
        %v712 = vpack.c.b16 %v616, %v604
        %v713 = vpack.c.b16 %v617, %v605
        %v714 = vpack.c.b16 %v618, %v606
        %v715 = vpack.c.b16 %v619, %v607
        %v716 = vpack.c.b16 %v620, %v608
        %v717 = vpack.c.b16 %v621, %v609
        %v718 = vpack.c.b16 %v622, %v610
        %v719 = vpack.c.b16 %v623, %v611
        %v720 = vpack.c.b16 %v624, %v612
        %v721 = vpack.c.b16 %v625, %v613
        %v722 = vpack.c.b16 %v626, %v614
        %v723 = vpack.c.b16 %v627, %v615
        %820 = vmatprep.subr.bf16.mxu0 %v629
        %821 = vmatpush1.bf16.msra.mxu0 %v628
        %822 = vmatprep.subr.bf16.mxu0 %v641
        %823 = vmatpush1.bf16.msra.mxu0 %v640
        %824 = vmatprep.subr.bf16.mxu0 %v653
        %825 = vmatpush1.bf16.msra.mxu0 %v652
        %826 = vmatprep.subr.bf16.mxu0 %v665
        %827 = vmatpush1.bf16.msra.mxu0 %v664
        %828 = vmatprep.subr.bf16.mxu0 %v677
        %829 = vmatpush1.bf16.msra.mxu0 %v676
        %830 = vmatprep.subr.bf16.mxu0 %v689
        %831 = vmatpush1.bf16.msra.mxu0 %v688
        %832 = vmatprep.subr.bf16.mxu0 %v701
        %833 = vmatpush1.bf16.msra.mxu0 %v700
        %834 = vmatprep.subr.bf16.mxu0 %v713
        %835 = vmatpush1.bf16.msra.mxu0 %v712
        %836 = vmatprep.subr.bf16.mxu0 0
        %837 = vmatpush1.bf16.msra.mxu0 0
        %838 = vmatprep.subr.bf16.mxu0 0
        %839 = vmatpush1.bf16.msra.mxu0 0
        %840 = vmatprep.subr.bf16.mxu0 0
        %841 = vmatpush1.bf16.msra.mxu0 0
        %842 = vmatprep.subr.bf16.mxu0 0
        %843 = vmatpush1.bf16.msra.mxu0 0
        %844 = vmatprep.subr.bf16.mxu0 0
        %845 = vmatpush1.bf16.msra.mxu0 0
        %846 = vmatprep.subr.bf16.mxu0 0
        %847 = vmatpush1.bf16.msra.mxu0 0
        %848 = vmatprep.subr.bf16.mxu0 0
        %849 = vmatpush1.bf16.msra.mxu0 0
        %850 = vmatprep.subr.bf16.mxu0 0
        %851 = vmatpush1.bf16.msra.mxu0 0
        %852 = vmatprep.mubr.bf16.mxu0 0
        %853 = vmatmul.mubr.bf16.gmra.mrb[0].mxu0 %v243
        %v854 = vpop.f32.mrb[0].mxu0
        %v855 = vadd.f32 0.0, %v854
        %v856 = vpop.f32.mrb[0].mxu0
        %v857 = vadd.f32 0.0, %v856
        %v858 = vpop.f32.mrb[0].mxu0
        %v859 = vpop.f32.mrb[0].mxu0
        %860 = vdwg.mxu0
        %861 = vmatprep.subr.bf16.mxu0 %v631
        %862 = vmatpush1.bf16.msra.mxu0 %v630
        %863 = vmatprep.subr.bf16.mxu0 %v643
        %864 = vmatpush1.bf16.msra.mxu0 %v642
        %865 = vmatprep.subr.bf16.mxu0 %v655
        %866 = vmatpush1.bf16.msra.mxu0 %v654
        %867 = vmatprep.subr.bf16.mxu0 %v667
        %868 = vmatpush1.bf16.msra.mxu0 %v666
        %869 = vmatprep.subr.bf16.mxu0 %v679
        %870 = vmatpush1.bf16.msra.mxu0 %v678
        %871 = vmatprep.subr.bf16.mxu0 %v691
        %872 = vmatpush1.bf16.msra.mxu0 %v690
        %873 = vmatprep.subr.bf16.mxu0 %v703
        %874 = vmatpush1.bf16.msra.mxu0 %v702
        %875 = vmatprep.subr.bf16.mxu0 %v715
        %876 = vmatpush1.bf16.msra.mxu0 %v714
        %877 = vmatprep.subr.bf16.mxu0 0
        %878 = vmatpush1.bf16.msra.mxu0 0
        %879 = vmatprep.subr.bf16.mxu0 0
        %880 = vmatpush1.bf16.msra.mxu0 0
        %881 = vmatprep.subr.bf16.mxu0 0
        %882 = vmatpush1.bf16.msra.mxu0 0
        %883 = vmatprep.subr.bf16.mxu0 0
        %884 = vmatpush1.bf16.msra.mxu0 0
        %885 = vmatprep.subr.bf16.mxu0 0
        %886 = vmatpush1.bf16.msra.mxu0 0
        %887 = vmatprep.subr.bf16.mxu0 0
        %888 = vmatpush1.bf16.msra.mxu0 0
        %889 = vmatprep.subr.bf16.mxu0 0
        %890 = vmatpush1.bf16.msra.mxu0 0
        %891 = vmatprep.subr.bf16.mxu0 0
        %892 = vmatpush1.bf16.msra.mxu0 0
        %893 = vmatprep.mubr.bf16.mxu0 0
        %894 = vmatmul.mubr.bf16.gmra.mrb[0].mxu0 %v243
        %v895 = vpop.f32.mrb[0].mxu0
        %v896 = vadd.f32 0.0, %v895
        %v897 = vpop.f32.mrb[0].mxu0
        %v898 = vadd.f32 0.0, %v897
        %v899 = vpop.f32.mrb[0].mxu0
        %v900 = vpop.f32.mrb[0].mxu0
        %901 = vdwg.mxu0
        %902 = vmatprep.subr.bf16.mxu0 %v633
        %903 = vmatpush1.bf16.msra.mxu0 %v632
        %904 = vmatprep.subr.bf16.mxu0 %v645
        %905 = vmatpush1.bf16.msra.mxu0 %v644
        %906 = vmatprep.subr.bf16.mxu0 %v657
        %907 = vmatpush1.bf16.msra.mxu0 %v656
        %908 = vmatprep.subr.bf16.mxu0 %v669
        %909 = vmatpush1.bf16.msra.mxu0 %v668
        %910 = vmatprep.subr.bf16.mxu0 %v681
        %911 = vmatpush1.bf16.msra.mxu0 %v680
        %912 = vmatprep.subr.bf16.mxu0 %v693
        %913 = vmatpush1.bf16.msra.mxu0 %v692
        %914 = vmatprep.subr.bf16.mxu0 %v705
        %915 = vmatpush1.bf16.msra.mxu0 %v704
        %916 = vmatprep.subr.bf16.mxu0 %v717
        %917 = vmatpush1.bf16.msra.mxu0 %v716
        %918 = vmatprep.subr.bf16.mxu0 0
        %919 = vmatpush1.bf16.msra.mxu0 0
        %920 = vmatprep.subr.bf16.mxu0 0
        %921 = vmatpush1.bf16.msra.mxu0 0
        %922 = vmatprep.subr.bf16.mxu0 0
        %923 = vmatpush1.bf16.msra.mxu0 0
        %924 = vmatprep.subr.bf16.mxu0 0
        %925 = vmatpush1.bf16.msra.mxu0 0
        %926 = vmatprep.subr.bf16.mxu0 0
        %927 = vmatpush1.bf16.msra.mxu0 0
        %928 = vmatprep.subr.bf16.mxu0 0
        %929 = vmatpush1.bf16.msra.mxu0 0
        %930 = vmatprep.subr.bf16.mxu0 0
        %931 = vmatpush1.bf16.msra.mxu0 0
        %932 = vmatprep.subr.bf16.mxu0 0
        %933 = vmatpush1.bf16.msra.mxu0 0
        %934 = vmatprep.mubr.bf16.mxu0 0
        %935 = vmatmul.mubr.bf16.gmra.mrb[0].mxu0 %v243
        %v936 = vpop.f32.mrb[0].mxu0
        %v937 = vadd.f32 0.0, %v936
        %v938 = vpop.f32.mrb[0].mxu0
        %v939 = vadd.f32 0.0, %v938
        %v940 = vpop.f32.mrb[0].mxu0
        %v941 = vpop.f32.mrb[0].mxu0
        %942 = vdwg.mxu0
        %943 = vmatprep.subr.bf16.mxu0 %v635
        %944 = vmatpush1.bf16.msra.mxu0 %v634
        %945 = vmatprep.subr.bf16.mxu0 %v647
        %946 = vmatpush1.bf16.msra.mxu0 %v646
        %947 = vmatprep.subr.bf16.mxu0 %v659
        %948 = vmatpush1.bf16.msra.mxu0 %v658
        %949 = vmatprep.subr.bf16.mxu0 %v671
        %950 = vmatpush1.bf16.msra.mxu0 %v670
        %951 = vmatprep.subr.bf16.mxu0 %v683
        %952 = vmatpush1.bf16.msra.mxu0 %v682
        %953 = vmatprep.subr.bf16.mxu0 %v695
        %954 = vmatpush1.bf16.msra.mxu0 %v694
        %955 = vmatprep.subr.bf16.mxu0 %v707
        %956 = vmatpush1.bf16.msra.mxu0 %v706
        %957 = vmatprep.subr.bf16.mxu0 %v719
        %958 = vmatpush1.bf16.msra.mxu0 %v718
        %959 = vmatprep.subr.bf16.mxu0 0
        %960 = vmatpush1.bf16.msra.mxu0 0
        %961 = vmatprep.subr.bf16.mxu0 0
        %962 = vmatpush1.bf16.msra.mxu0 0
        %963 = vmatprep.subr.bf16.mxu0 0
        %964 = vmatpush1.bf16.msra.mxu0 0
        %965 = vmatprep.subr.bf16.mxu0 0
        %966 = vmatpush1.bf16.msra.mxu0 0
        %967 = vmatprep.subr.bf16.mxu0 0
        %968 = vmatpush1.bf16.msra.mxu0 0
        %969 = vmatprep.subr.bf16.mxu0 0
        %970 = vmatpush1.bf16.msra.mxu0 0
        %971 = vmatprep.subr.bf16.mxu0 0
        %972 = vmatpush1.bf16.msra.mxu0 0
        %973 = vmatprep.subr.bf16.mxu0 0
        %974 = vmatpush1.bf16.msra.mxu0 0
        %975 = vmatprep.mubr.bf16.mxu0 0
        %976 = vmatmul.mubr.bf16.gmra.mrb[0].mxu0 %v243
        %v977 = vpop.f32.mrb[0].mxu0
        %v978 = vadd.f32 0.0, %v977
        %v979 = vpop.f32.mrb[0].mxu0
        %v980 = vadd.f32 0.0, %v979
        %v981 = vpop.f32.mrb[0].mxu0
        %v982 = vpop.f32.mrb[0].mxu0
        %983 = vdwg.mxu0
        %984 = vmatprep.subr.bf16.mxu0 %v637
        %985 = vmatpush1.bf16.msra.mxu0 %v636
        %986 = vmatprep.subr.bf16.mxu0 %v649
        %987 = vmatpush1.bf16.msra.mxu0 %v648
        %988 = vmatprep.subr.bf16.mxu0 %v661
        %989 = vmatpush1.bf16.msra.mxu0 %v660
        %990 = vmatprep.subr.bf16.mxu0 %v673
        %991 = vmatpush1.bf16.msra.mxu0 %v672
        %992 = vmatprep.subr.bf16.mxu0 %v685
        %993 = vmatpush1.bf16.msra.mxu0 %v684
        %994 = vmatprep.subr.bf16.mxu0 %v697
        %995 = vmatpush1.bf16.msra.mxu0 %v696
        %996 = vmatprep.subr.bf16.mxu0 %v709
        %997 = vmatpush1.bf16.msra.mxu0 %v708
        %998 = vmatprep.subr.bf16.mxu0 %v721
        %999 = vmatpush1.bf16.msra.mxu0 %v720
        %1000 = vmatprep.subr.bf16.mxu0 0
        %1001 = vmatpush1.bf16.msra.mxu0 0
        %1002 = vmatprep.subr.bf16.mxu0 0
        %1003 = vmatpush1.bf16.msra.mxu0 0
        %1004 = vmatprep.subr.bf16.mxu0 0
        %1005 = vmatpush1.bf16.msra.mxu0 0
        %1006 = vmatprep.subr.bf16.mxu0 0
        %1007 = vmatpush1.bf16.msra.mxu0 0
        %1008 = vmatprep.subr.bf16.mxu0 0
        %1009 = vmatpush1.bf16.msra.mxu0 0
        %1010 = vmatprep.subr.bf16.mxu0 0
        %1011 = vmatpush1.bf16.msra.mxu0 0
        %1012 = vmatprep.subr.bf16.mxu0 0
        %1013 = vmatpush1.bf16.msra.mxu0 0
        %1014 = vmatprep.subr.bf16.mxu0 0
        %1015 = vmatpush1.bf16.msra.mxu0 0
        %1016 = vmatprep.mubr.bf16.mxu0 0
        %1017 = vmatmul.mubr.bf16.gmra.mrb[0].mxu0 %v243
        %v1018 = vpop.f32.mrb[0].mxu0
        %v1019 = vadd.f32 0.0, %v1018
        %v1020 = vpop.f32.mrb[0].mxu0
        %v1021 = vadd.f32 0.0, %v1020
        %v1022 = vpop.f32.mrb[0].mxu0
        %v1023 = vpop.f32.mrb[0].mxu0
        %1024 = vdwg.mxu0
        %1025 = vmatprep.subr.bf16.mxu0 %v639
        %1026 = vmatpush1.bf16.msra.mxu0 %v638
        %1027 = vmatprep.subr.bf16.mxu0 %v651
        %1028 = vmatpush1.bf16.msra.mxu0 %v650
        %1029 = vmatprep.subr.bf16.mxu0 %v663
        %1030 = vmatpush1.bf16.msra.mxu0 %v662
        %1031 = vmatprep.subr.bf16.mxu0 %v675
        %1032 = vmatpush1.bf16.msra.mxu0 %v674
        %1033 = vmatprep.subr.bf16.mxu0 %v687
        %1034 = vmatpush1.bf16.msra.mxu0 %v686
        %1035 = vmatprep.subr.bf16.mxu0 %v699
        %1036 = vmatpush1.bf16.msra.mxu0 %v698
        %1037 = vmatprep.subr.bf16.mxu0 %v711
        %1038 = vmatpush1.bf16.msra.mxu0 %v710
        %1039 = vmatprep.subr.bf16.mxu0 %v723
        %1040 = vmatpush1.bf16.msra.mxu0 %v722
        %1041 = vmatprep.subr.bf16.mxu0 0
        %1042 = vmatpush1.bf16.msra.mxu0 0
        %1043 = vmatprep.subr.bf16.mxu0 0
        %1044 = vmatpush1.bf16.msra.mxu0 0
        %1045 = vmatprep.subr.bf16.mxu0 0
        %1046 = vmatpush1.bf16.msra.mxu0 0
        %1047 = vmatprep.subr.bf16.mxu0 0
        %1048 = vmatpush1.bf16.msra.mxu0 0
        %1049 = vmatprep.subr.bf16.mxu0 0
        %1050 = vmatpush1.bf16.msra.mxu0 0
        %1051 = vmatprep.subr.bf16.mxu0 0
        %1052 = vmatpush1.bf16.msra.mxu0 0
        %1053 = vmatprep.subr.bf16.mxu0 0
        %1054 = vmatpush1.bf16.msra.mxu0 0
        %1055 = vmatprep.subr.bf16.mxu0 0
        %1056 = vmatpush1.bf16.msra.mxu0 0
        %1057 = vmatprep.mubr.bf16.mxu0 0
        %1058 = vmatmul.mubr.bf16.gmra.mrb[0].mxu0 %v243
        %v1059 = vpop.f32.mrb[0].mxu0
        %v1060 = vadd.f32 0.0, %v1059
        %v1061 = vpop.f32.mrb[0].mxu0
        %v1062 = vadd.f32 0.0, %v1061
        %v1063 = vpop.f32.mrb[0].mxu0
        %v1064 = vpop.f32.mrb[0].mxu0
        %1065 = vdwg.mxu0
        %v1066 = vpack.c.bf16 %v855, %v855
        %v1067 = vpack.c.bf16 %v857, %v857
        %v1068 = vpack.c.bf16 %v896, %v896
        %v1069 = vpack.c.bf16 %v898, %v898
        %v1070 = vpack.c.bf16 %v937, %v937
        %v1071 = vpack.c.bf16 %v939, %v939
        %v1072 = vpack.c.bf16 %v978, %v978
        %v1073 = vpack.c.bf16 %v980, %v980
        %v1074 = vpack.c.bf16 %v1019, %v1019
        %v1075 = vpack.c.bf16 %v1021, %v1021
        %v1076 = vpack.c.bf16 %v1060, %v1060
        %v1077 = vpack.c.bf16 %v1062, %v1062
        %1078 = vst [vmem:[#allocation2] sm:$0xf] %v1066
        %1079 = vst [vmem:[#allocation3] sm:$0xf] %v1070
        %1080 = vst [vmem:[#allocation4] sm:$0xf] %v1074
        %s1081 = scalar_lea.vmem [#allocation2], 4
        %1082 = vst [vmem:[%s1081] sm:$0xf] %v1067
        %s1083 = scalar_lea.vmem [#allocation3], 4
        %1084 = vst [vmem:[%s1083] sm:$0xf] %v1071
        %s1085 = scalar_lea.vmem [#allocation4], 4
        %1086 = vst [vmem:[%s1085] sm:$0xf] %v1075
        %s1087 = scalar_lea.vmem [#allocation2], 8
        %1088 = vst [vmem:[%s1087] sm:$0xf] %v1068
        %s1089 = scalar_lea.vmem [#allocation3], 8
        %1090 = vst [vmem:[%s1089] sm:$0xf] %v1072
        %s1091 = scalar_lea.vmem [#allocation4], 8
        %1092 = vst [vmem:[%s1091] sm:$0xf] %v1076
        %s1093 = scalar_lea.vmem [#allocation2], 12
        %1094 = vst [vmem:[%s1093] sm:$0xf] %v1069
        %s1095 = scalar_lea.vmem [#allocation3], 12
        %1096 = vst [vmem:[%s1095] sm:$0xf] %v1073
        %s1097 = scalar_lea.vmem [#allocation4], 12
        %1098 = vst [vmem:[%s1097] sm:$0xf] %v1077
        %v1099 = vld [vmem:[#allocation2] sm:$0xf]
        %v1100 = vld [vmem:[#allocation2 + $0x4] sm:$0xf]
        %v1101 = vld [vmem:[#allocation2 + $0x8] sm:$0xf]
        %v1102 = vld [vmem:[#allocation2 + $0xc] sm:$0xf]
        %v1103 = vld [vmem:[#allocation3] sm:$0xf]
        %v1104 = vld [vmem:[#allocation3 + $0x4] sm:$0xf]
        %v1105 = vld [vmem:[#allocation3 + $0x8] sm:$0xf]
        %v1106 = vld [vmem:[#allocation3 + $0xc] sm:$0xf]
        %1107 = vmatprep.subr.bf16.mxu0 0
        %1108 = vmatpush1.bf16.xpose.msra.mxu0 %v1103
        %1109 = vmatprep.subr.bf16.mxu0 0
        %1110 = vmatpush1.bf16.xpose.msra.mxu0 0
        %1111 = vmatprep.subr.bf16.mxu0 0
        %1112 = vmatpush1.bf16.xpose.msra.mxu0 0
        %1113 = vmatprep.subr.bf16.mxu0 0
        %1114 = vmatpush1.bf16.xpose.msra.mxu0 0
        %1115 = vmatprep.subr.bf16.mxu0 0
        %1116 = vmatpush1.bf16.xpose.msra.mxu0 0
        %1117 = vmatprep.subr.bf16.mxu0 0
        %1118 = vmatpush1.bf16.xpose.msra.mxu0 0
        %1119 = vmatprep.subr.bf16.mxu0 0
        %1120 = vmatpush1.bf16.xpose.msra.mxu0 0
        %1121 = vmatprep.subr.bf16.mxu0 0
        %1122 = vmatpush1.bf16.xpose.msra.mxu0 0
        %1123 = vmatprep.subr.bf16.mxu0 0
        %1124 = vmatpush1.bf16.xpose.msra.mxu0 0
        %1125 = vmatprep.subr.bf16.mxu0 0
        %1126 = vmatpush1.bf16.xpose.msra.mxu0 0
        %1127 = vmatprep.subr.bf16.mxu0 0
        %1128 = vmatpush1.bf16.xpose.msra.mxu0 0
        %1129 = vmatprep.subr.bf16.mxu0 0
        %1130 = vmatpush1.bf16.xpose.msra.mxu0 0
        %1131 = vmatprep.subr.bf16.mxu0 0
        %1132 = vmatpush1.bf16.xpose.msra.mxu0 0
        %1133 = vmatprep.subr.bf16.mxu0 0
        %1134 = vmatpush1.bf16.xpose.msra.mxu0 0
        %1135 = vmatprep.subr.bf16.mxu0 0
        %1136 = vmatpush1.bf16.xpose.msra.mxu0 0
        %1137 = vmatprep.subr.bf16.mxu0 0
        %1138 = vmatpush1.bf16.xpose.msra.mxu0 0
        %1139 = vmatprep.mubr.bf16.mxu0 0
        %1140 = vmatmul.mubr.bf16.gmra.mrb[0].mxu0 %v1099
        %v1141 = vpop.f32.mrb[0].mxu0
        %v1142 = vadd.f32 0.0, %v1141
        %v1143 = vpop.f32.mrb[0].mxu0
        %v1144 = vpop.f32.mrb[0].mxu0
        %v1145 = vpop.f32.mrb[0].mxu0
        %1146 = vdwg.mxu0
        %1147 = vmatprep.subr.bf16.mxu0 0
        %1148 = vmatpush1.bf16.xpose.msra.mxu0 %v1104
        %1149 = vmatprep.subr.bf16.mxu0 0
        %1150 = vmatpush1.bf16.xpose.msra.mxu0 0
        %1151 = vmatprep.subr.bf16.mxu0 0
        %1152 = vmatpush1.bf16.xpose.msra.mxu0 0
        %1153 = vmatprep.subr.bf16.mxu0 0
        %1154 = vmatpush1.bf16.xpose.msra.mxu0 0
        %1155 = vmatprep.subr.bf16.mxu0 0
        %1156 = vmatpush1.bf16.xpose.msra.mxu0 0
        %1157 = vmatprep.subr.bf16.mxu0 0
        %1158 = vmatpush1.bf16.xpose.msra.mxu0 0
        %1159 = vmatprep.subr.bf16.mxu0 0
        %1160 = vmatpush1.bf16.xpose.msra.mxu0 0
        %1161 = vmatprep.subr.bf16.mxu0 0
        %1162 = vmatpush1.bf16.xpose.msra.mxu0 0
        %1163 = vmatprep.subr.bf16.mxu0 0
        %1164 = vmatpush1.bf16.xpose.msra.mxu0 0
        %1165 = vmatprep.subr.bf16.mxu0 0
        %1166 = vmatpush1.bf16.xpose.msra.mxu0 0
        %1167 = vmatprep.subr.bf16.mxu0 0
        %1168 = vmatpush1.bf16.xpose.msra.mxu0 0
        %1169 = vmatprep.subr.bf16.mxu0 0
        %1170 = vmatpush1.bf16.xpose.msra.mxu0 0
        %1171 = vmatprep.subr.bf16.mxu0 0
        %1172 = vmatpush1.bf16.xpose.msra.mxu0 0
        %1173 = vmatprep.subr.bf16.mxu0 0
        %1174 = vmatpush1.bf16.xpose.msra.mxu0 0
        %1175 = vmatprep.subr.bf16.mxu0 0
        %1176 = vmatpush1.bf16.xpose.msra.mxu0 0
        %1177 = vmatprep.subr.bf16.mxu0 0
        %1178 = vmatpush1.bf16.xpose.msra.mxu0 0
        %1179 = vmatprep.mubr.bf16.mxu0 0
        %1180 = vmatmul.mubr.bf16.gmra.mrb[0].mxu0 %v1100
        %v1181 = vpop.f32.mrb[0].mxu0
        %v1182 = vadd.f32 0.0, %v1181
        %v1183 = vpop.f32.mrb[0].mxu0
        %v1184 = vpop.f32.mrb[0].mxu0
        %v1185 = vpop.f32.mrb[0].mxu0
        %1186 = vdwg.mxu0
        %1187 = vmatprep.subr.bf16.mxu0 0
        %1188 = vmatpush1.bf16.xpose.msra.mxu0 %v1105
        %1189 = vmatprep.subr.bf16.mxu0 0
        %1190 = vmatpush1.bf16.xpose.msra.mxu0 0
        %1191 = vmatprep.subr.bf16.mxu0 0
        %1192 = vmatpush1.bf16.xpose.msra.mxu0 0
        %1193 = vmatprep.subr.bf16.mxu0 0
        %1194 = vmatpush1.bf16.xpose.msra.mxu0 0
        %1195 = vmatprep.subr.bf16.mxu0 0
        %1196 = vmatpush1.bf16.xpose.msra.mxu0 0
        %1197 = vmatprep.subr.bf16.mxu0 0
        %1198 = vmatpush1.bf16.xpose.msra.mxu0 0
        %1199 = vmatprep.subr.bf16.mxu0 0
        %1200 = vmatpush1.bf16.xpose.msra.mxu0 0
        %1201 = vmatprep.subr.bf16.mxu0 0
        %1202 = vmatpush1.bf16.xpose.msra.mxu0 0
        %1203 = vmatprep.subr.bf16.mxu0 0
        %1204 = vmatpush1.bf16.xpose.msra.mxu0 0
        %1205 = vmatprep.subr.bf16.mxu0 0
        %1206 = vmatpush1.bf16.xpose.msra.mxu0 0
        %1207 = vmatprep.subr.bf16.mxu0 0
        %1208 = vmatpush1.bf16.xpose.msra.mxu0 0
        %1209 = vmatprep.subr.bf16.mxu0 0
        %1210 = vmatpush1.bf16.xpose.msra.mxu0 0
        %1211 = vmatprep.subr.bf16.mxu0 0
        %1212 = vmatpush1.bf16.xpose.msra.mxu0 0
        %1213 = vmatprep.subr.bf16.mxu0 0
        %1214 = vmatpush1.bf16.xpose.msra.mxu0 0
        %1215 = vmatprep.subr.bf16.mxu0 0
        %1216 = vmatpush1.bf16.xpose.msra.mxu0 0
        %1217 = vmatprep.subr.bf16.mxu0 0
        %1218 = vmatpush1.bf16.xpose.msra.mxu0 0
        %1219 = vmatprep.mubr.bf16.mxu0 0
        %1220 = vmatmul.mubr.bf16.gmra.mrb[0].mxu0 %v1101
        %v1221 = vpop.f32.mrb[0].mxu0
        %v1222 = vadd.f32 0.0, %v1221
        %v1223 = vpop.f32.mrb[0].mxu0
        %v1224 = vpop.f32.mrb[0].mxu0
        %v1225 = vpop.f32.mrb[0].mxu0
        %1226 = vdwg.mxu0
        %1227 = vmatprep.subr.bf16.mxu0 0
        %1228 = vmatpush1.bf16.xpose.msra.mxu0 %v1106
        %1229 = vmatprep.subr.bf16.mxu0 0
        %1230 = vmatpush1.bf16.xpose.msra.mxu0 0
        %1231 = vmatprep.subr.bf16.mxu0 0
        %1232 = vmatpush1.bf16.xpose.msra.mxu0 0
        %1233 = vmatprep.subr.bf16.mxu0 0
        %1234 = vmatpush1.bf16.xpose.msra.mxu0 0
        %1235 = vmatprep.subr.bf16.mxu0 0
        %1236 = vmatpush1.bf16.xpose.msra.mxu0 0
        %1237 = vmatprep.subr.bf16.mxu0 0
        %1238 = vmatpush1.bf16.xpose.msra.mxu0 0
        %1239 = vmatprep.subr.bf16.mxu0 0
        %1240 = vmatpush1.bf16.xpose.msra.mxu0 0
        %1241 = vmatprep.subr.bf16.mxu0 0
        %1242 = vmatpush1.bf16.xpose.msra.mxu0 0
        %1243 = vmatprep.subr.bf16.mxu0 0
        %1244 = vmatpush1.bf16.xpose.msra.mxu0 0
        %1245 = vmatprep.subr.bf16.mxu0 0
        %1246 = vmatpush1.bf16.xpose.msra.mxu0 0
        %1247 = vmatprep.subr.bf16.mxu0 0
        %1248 = vmatpush1.bf16.xpose.msra.mxu0 0
        %1249 = vmatprep.subr.bf16.mxu0 0
        %1250 = vmatpush1.bf16.xpose.msra.mxu0 0
        %1251 = vmatprep.subr.bf16.mxu0 0
        %1252 = vmatpush1.bf16.xpose.msra.mxu0 0
        %1253 = vmatprep.subr.bf16.mxu0 0
        %1254 = vmatpush1.bf16.xpose.msra.mxu0 0
        %1255 = vmatprep.subr.bf16.mxu0 0
        %1256 = vmatpush1.bf16.xpose.msra.mxu0 0
        %1257 = vmatprep.subr.bf16.mxu0 0
        %1258 = vmatpush1.bf16.xpose.msra.mxu0 0
        %1259 = vmatprep.mubr.bf16.mxu0 0
        %1260 = vmatmul.mubr.bf16.gmra.mrb[0].mxu0 %v1102
        %v1261 = vpop.f32.mrb[0].mxu0
        %v1262 = vadd.f32 0.0, %v1261
        %v1263 = vpop.f32.mrb[0].mxu0
        %v1264 = vpop.f32.mrb[0].mxu0
        %v1265 = vpop.f32.mrb[0].mxu0
        %1266 = vdwg.mxu0
        %vm1267 = vcmask 64512
        %v1268 = vsel %vm1267, %v1142, -inf
        %1269 = vmax.xlane.f32.xlu0 %v1268
        %v1270 = vpop.xlane.xlu0 %1269
        %v1271 = vsel %vm1267, %v1182, -inf
        %1272 = vmax.xlane.f32.xlu0 %v1271
        %v1273 = vpop.xlane.xlu0 %1272
        %v1274 = vsel %vm1267, %v1222, -inf
        %1275 = vmax.xlane.f32.xlu0 %v1274
        %v1276 = vpop.xlane.xlu0 %1275
        %v1277 = vsel %vm1267, %v1262, -inf
        %1278 = vmax.xlane.f32.xlu0 %v1277
        %v1279 = vpop.xlane.xlu0 %1278
        %v1280 = vsub.f32 %v1142, %v1270
        %v1281 = vsub.f32 %v1182, %v1273
        %v1282 = vsub.f32 %v1222, %v1276
        %v1283 = vsub.f32 %v1262, %v1279
        %v1284 = vmul.f32 %v1280, 1.442695
        %v1285 = vpow.pop %v1284
        %v1286 = vmul.f32 %v1281, 1.442695
        %v1287 = vpow.pop %v1286
        %v1288 = vmul.f32 %v1282, 1.442695
        %v1289 = vpow.pop %v1288
        %v1290 = vmul.f32 %v1283, 1.442695
        %v1291 = vpow.pop %v1290
        %v1292 = vsel %vm1267, %v1285, 0.0
        %1293 = vadd.xlane.f32.xlu0 %v1292
        %v1294 = vpop.xlane.xlu0 %1293
        %v1295 = vsel %vm1267, %v1287, 0.0
        %1296 = vadd.xlane.f32.xlu0 %v1295
        %v1297 = vpop.xlane.xlu0 %1296
        %v1298 = vsel %vm1267, %v1289, 0.0
        %1299 = vadd.xlane.f32.xlu0 %v1298
        %v1300 = vpop.xlane.xlu0 %1299
        %v1301 = vsel %vm1267, %v1291, 0.0
        %1302 = vadd.xlane.f32.xlu0 %v1301
        %v1303 = vpop.xlane.xlu0 %1302
        %v1304 = vrcp.pop %v1294
        %v1305 = vrcp.pop %v1297
        %v1306 = vrcp.pop %v1300
        %v1307 = vrcp.pop %v1303
        %v1308 = vmul.f32 %v1285, %v1304
        %v1309 = vmul.f32 %v1287, %v1305
        %v1310 = vmul.f32 %v1289, %v1306
        %v1311 = vmul.f32 %v1291, %v1307
        %v1312 = vpack.c.bf16 %v1308, %v1308
        %v1313 = vpack.c.bf16 %v1309, %v1309
        %v1314 = vpack.c.bf16 %v1310, %v1310
        %v1315 = vpack.c.bf16 %v1311, %v1311
        %v1316 = vld [vmem:[#allocation4] sm:$0xf]
        %v1317 = vld [vmem:[#allocation4 + $0x4] sm:$0xf]
        %v1318 = vld [vmem:[#allocation4 + $0x8] sm:$0xf]
        %v1319 = vld [vmem:[#allocation4 + $0xc] sm:$0xf]
        %v1321 = vsel %vm1267, %v1312, 0
        %vm1323 = vcmask 1043456
        %v1325 = vsel %vm1323, %v1316, 0
        %1327 = vmatprep.subr.bf16.mxu0 0
        %1328 = vmatpush1.bf16.msra.mxu0 %v1325
        %1329 = vmatprep.subr.bf16.mxu0 0
        %1330 = vmatpush1.bf16.msra.mxu0 0
        %1331 = vmatprep.subr.bf16.mxu0 0
        %1332 = vmatpush1.bf16.msra.mxu0 0
        %1333 = vmatprep.subr.bf16.mxu0 0
        %1334 = vmatpush1.bf16.msra.mxu0 0
        %1335 = vmatprep.subr.bf16.mxu0 0
        %1336 = vmatpush1.bf16.msra.mxu0 0
        %1337 = vmatprep.subr.bf16.mxu0 0
        %1338 = vmatpush1.bf16.msra.mxu0 0
        %1339 = vmatprep.subr.bf16.mxu0 0
        %1340 = vmatpush1.bf16.msra.mxu0 0
        %1341 = vmatprep.subr.bf16.mxu0 0
        %1342 = vmatpush1.bf16.msra.mxu0 0
        %1343 = vmatprep.subr.bf16.mxu0 0
        %1344 = vmatpush1.bf16.msra.mxu0 0
        %1345 = vmatprep.subr.bf16.mxu0 0
        %1346 = vmatpush1.bf16.msra.mxu0 0
        %1347 = vmatprep.subr.bf16.mxu0 0
        %1348 = vmatpush1.bf16.msra.mxu0 0
        %1349 = vmatprep.subr.bf16.mxu0 0
        %1350 = vmatpush1.bf16.msra.mxu0 0
        %1351 = vmatprep.subr.bf16.mxu0 0
        %1352 = vmatpush1.bf16.msra.mxu0 0
        %1353 = vmatprep.subr.bf16.mxu0 0
        %1354 = vmatpush1.bf16.msra.mxu0 0
        %1355 = vmatprep.subr.bf16.mxu0 0
        %1356 = vmatpush1.bf16.msra.mxu0 0
        %1357 = vmatprep.subr.bf16.mxu0 0
        %1358 = vmatpush1.bf16.msra.mxu0 0
        %1359 = vmatprep.mubr.bf16.mxu0 0
        %1360 = vmatmul.mubr.bf16.gmra.mrb[0].mxu0 %v1321
        %v1361 = vpop.f32.mrb[0].mxu0
        %v1362 = vadd.f32 0.0, %v1361
        %v1363 = vpop.f32.mrb[0].mxu0
        %v1364 = vpop.f32.mrb[0].mxu0
        %v1365 = vpop.f32.mrb[0].mxu0
        %1366 = vdwg.mxu0
        %v1368 = vsel %vm1267, %v1313, 0
        %v1371 = vsel %vm1323, %v1317, 0
        %1373 = vmatprep.subr.bf16.mxu0 0
        %1374 = vmatpush1.bf16.msra.mxu0 %v1371
        %1375 = vmatprep.subr.bf16.mxu0 0
        %1376 = vmatpush1.bf16.msra.mxu0 0
        %1377 = vmatprep.subr.bf16.mxu0 0
        %1378 = vmatpush1.bf16.msra.mxu0 0
        %1379 = vmatprep.subr.bf16.mxu0 0
        %1380 = vmatpush1.bf16.msra.mxu0 0
        %1381 = vmatprep.subr.bf16.mxu0 0
        %1382 = vmatpush1.bf16.msra.mxu0 0
        %1383 = vmatprep.subr.bf16.mxu0 0
        %1384 = vmatpush1.bf16.msra.mxu0 0
        %1385 = vmatprep.subr.bf16.mxu0 0
        %1386 = vmatpush1.bf16.msra.mxu0 0
        %1387 = vmatprep.subr.bf16.mxu0 0
        %1388 = vmatpush1.bf16.msra.mxu0 0
        %1389 = vmatprep.subr.bf16.mxu0 0
        %1390 = vmatpush1.bf16.msra.mxu0 0
        %1391 = vmatprep.subr.bf16.mxu0 0
        %1392 = vmatpush1.bf16.msra.mxu0 0
        %1393 = vmatprep.subr.bf16.mxu0 0
        %1394 = vmatpush1.bf16.msra.mxu0 0
        %1395 = vmatprep.subr.bf16.mxu0 0
        %1396 = vmatpush1.bf16.msra.mxu0 0
        %1397 = vmatprep.subr.bf16.mxu0 0
        %1398 = vmatpush1.bf16.msra.mxu0 0
        %1399 = vmatprep.subr.bf16.mxu0 0
        %1400 = vmatpush1.bf16.msra.mxu0 0
        %1401 = vmatprep.subr.bf16.mxu0 0
        %1402 = vmatpush1.bf16.msra.mxu0 0
        %1403 = vmatprep.subr.bf16.mxu0 0
        %1404 = vmatpush1.bf16.msra.mxu0 0
        %1405 = vmatprep.mubr.bf16.mxu0 0
        %1406 = vmatmul.mubr.bf16.gmra.mrb[0].mxu0 %v1368
        %v1407 = vpop.f32.mrb[0].mxu0
        %v1408 = vadd.f32 0.0, %v1407
        %v1409 = vpop.f32.mrb[0].mxu0
        %v1410 = vpop.f32.mrb[0].mxu0
        %v1411 = vpop.f32.mrb[0].mxu0
        %1412 = vdwg.mxu0
        %v1414 = vsel %vm1267, %v1314, 0
        %v1417 = vsel %vm1323, %v1318, 0
        %1419 = vmatprep.subr.bf16.mxu0 0
        %1420 = vmatpush1.bf16.msra.mxu0 %v1417
        %1421 = vmatprep.subr.bf16.mxu0 0
        %1422 = vmatpush1.bf16.msra.mxu0 0
        %1423 = vmatprep.subr.bf16.mxu0 0
        %1424 = vmatpush1.bf16.msra.mxu0 0
        %1425 = vmatprep.subr.bf16.mxu0 0
        %1426 = vmatpush1.bf16.msra.mxu0 0
        %1427 = vmatprep.subr.bf16.mxu0 0
        %1428 = vmatpush1.bf16.msra.mxu0 0
        %1429 = vmatprep.subr.bf16.mxu0 0
        %1430 = vmatpush1.bf16.msra.mxu0 0
        %1431 = vmatprep.subr.bf16.mxu0 0
        %1432 = vmatpush1.bf16.msra.mxu0 0
        %1433 = vmatprep.subr.bf16.mxu0 0
        %1434 = vmatpush1.bf16.msra.mxu0 0
        %1435 = vmatprep.subr.bf16.mxu0 0
        %1436 = vmatpush1.bf16.msra.mxu0 0
        %1437 = vmatprep.subr.bf16.mxu0 0
        %1438 = vmatpush1.bf16.msra.mxu0 0
        %1439 = vmatprep.subr.bf16.mxu0 0
        %1440 = vmatpush1.bf16.msra.mxu0 0
        %1441 = vmatprep.subr.bf16.mxu0 0
        %1442 = vmatpush1.bf16.msra.mxu0 0
        %1443 = vmatprep.subr.bf16.mxu0 0
        %1444 = vmatpush1.bf16.msra.mxu0 0
        %1445 = vmatprep.subr.bf16.mxu0 0
        %1446 = vmatpush1.bf16.msra.mxu0 0
        %1447 = vmatprep.subr.bf16.mxu0 0
        %1448 = vmatpush1.bf16.msra.mxu0 0
        %1449 = vmatprep.subr.bf16.mxu0 0
        %1450 = vmatpush1.bf16.msra.mxu0 0
        %1451 = vmatprep.mubr.bf16.mxu0 0
        %1452 = vmatmul.mubr.bf16.gmra.mrb[0].mxu0 %v1414
        %v1453 = vpop.f32.mrb[0].mxu0
        %v1454 = vadd.f32 0.0, %v1453
        %v1455 = vpop.f32.mrb[0].mxu0
        %v1456 = vpop.f32.mrb[0].mxu0
        %v1457 = vpop.f32.mrb[0].mxu0
        %1458 = vdwg.mxu0
        %v1460 = vsel %vm1267, %v1315, 0
        %v1463 = vsel %vm1323, %v1319, 0
        %1465 = vmatprep.subr.bf16.mxu0 0
        %1466 = vmatpush1.bf16.msra.mxu0 %v1463
        %1467 = vmatprep.subr.bf16.mxu0 0
        %1468 = vmatpush1.bf16.msra.mxu0 0
        %1469 = vmatprep.subr.bf16.mxu0 0
        %1470 = vmatpush1.bf16.msra.mxu0 0
        %1471 = vmatprep.subr.bf16.mxu0 0
        %1472 = vmatpush1.bf16.msra.mxu0 0
        %1473 = vmatprep.subr.bf16.mxu0 0
        %1474 = vmatpush1.bf16.msra.mxu0 0
        %1475 = vmatprep.subr.bf16.mxu0 0
        %1476 = vmatpush1.bf16.msra.mxu0 0
        %1477 = vmatprep.subr.bf16.mxu0 0
        %1478 = vmatpush1.bf16.msra.mxu0 0
        %1479 = vmatprep.subr.bf16.mxu0 0
        %1480 = vmatpush1.bf16.msra.mxu0 0
        %1481 = vmatprep.subr.bf16.mxu0 0
        %1482 = vmatpush1.bf16.msra.mxu0 0
        %1483 = vmatprep.subr.bf16.mxu0 0
        %1484 = vmatpush1.bf16.msra.mxu0 0
        %1485 = vmatprep.subr.bf16.mxu0 0
        %1486 = vmatpush1.bf16.msra.mxu0 0
        %1487 = vmatprep.subr.bf16.mxu0 0
        %1488 = vmatpush1.bf16.msra.mxu0 0
        %1489 = vmatprep.subr.bf16.mxu0 0
        %1490 = vmatpush1.bf16.msra.mxu0 0
        %1491 = vmatprep.subr.bf16.mxu0 0
        %1492 = vmatpush1.bf16.msra.mxu0 0
        %1493 = vmatprep.subr.bf16.mxu0 0
        %1494 = vmatpush1.bf16.msra.mxu0 0
        %1495 = vmatprep.subr.bf16.mxu0 0
        %1496 = vmatpush1.bf16.msra.mxu0 0
        %1497 = vmatprep.mubr.bf16.mxu0 0
        %1498 = vmatmul.mubr.bf16.gmra.mrb[0].mxu0 %v1460
        %v1499 = vpop.f32.mrb[0].mxu0
        %v1500 = vadd.f32 0.0, %v1499
        %v1501 = vpop.f32.mrb[0].mxu0
        %v1502 = vpop.f32.mrb[0].mxu0
        %v1503 = vpop.f32.mrb[0].mxu0
        %1504 = vdwg.mxu0
        %v1505 = vpack.c.bf16 %v1362, %v1362
        %v1506 = vpack.c.bf16 %v1408, %v1408
        %v1507 = vpack.c.bf16 %v1454, %v1454
        %v1508 = vpack.c.bf16 %v1500, %v1500
        %1509 = vst [vmem:[#allocation5] sm:$0xf] %v1505
        %1510 = vst [vmem:[#allocation5 + $0x4] sm:$0xf] %v1506
        %1511 = vst [vmem:[#allocation5 + $0x8] sm:$0xf] %v1507
        %1512 = vst [vmem:[#allocation5 + $0xc] sm:$0xf] %v1508
        %v1513 = vld [vmem:[#allocation5] sm:$0xff]
        %v1514 = vld [vmem:[#allocation5 + $0x8] sm:$0xff]
        %v1515 = vld [vmem:[#allocation11] sm:$0xf]
        %v1516 = vld [vmem:[#allocation11 + $0x4] sm:$0xf]
        %v1517 = vld [vmem:[#allocation11 + $0x8] sm:$0xf]
        %v1518 = vld [vmem:[#allocation11 + $0xc] sm:$0xf]
        %v1519 = vld [vmem:[#allocation11 + $0x10] sm:$0xf]
        %v1520 = vld [vmem:[#allocation11 + $0x14] sm:$0xf]
        %v1521 = vld [vmem:[#allocation11 + $0x18] sm:$0xf]
        %v1522 = vld [vmem:[#allocation11 + $0x1c] sm:$0xf]
        %v1523 = vld [vmem:[#allocation11 + $0x20] sm:$0xf]
        %v1524 = vld [vmem:[#allocation11 + $0x24] sm:$0xf]
        %v1525 = vld [vmem:[#allocation11 + $0x28] sm:$0xf]
        %v1526 = vld [vmem:[#allocation11 + $0x2c] sm:$0xf]
        %v1527 = vld [vmem:[#allocation11 + $0x30] sm:$0xf]
        %v1528 = vld [vmem:[#allocation11 + $0x34] sm:$0xf]
        %v1529 = vld [vmem:[#allocation11 + $0x38] sm:$0xf]
        %v1530 = vld [vmem:[#allocation11 + $0x3c] sm:$0xf]
        %v1531 = vld [vmem:[#allocation11 + $0x40] sm:$0xf]
        %v1532 = vld [vmem:[#allocation11 + $0x44] sm:$0xf]
        %v1533 = vld [vmem:[#allocation11 + $0x48] sm:$0xf]
        %v1534 = vld [vmem:[#allocation11 + $0x4c] sm:$0xf]
        %v1535 = vld [vmem:[#allocation11 + $0x50] sm:$0xf]
        %v1536 = vld [vmem:[#allocation11 + $0x54] sm:$0xf]
        %v1537 = vld [vmem:[#allocation11 + $0x58] sm:$0xf]
        %v1538 = vld [vmem:[#allocation11 + $0x5c] sm:$0xf]
        %v1539 = vld [vmem:[#allocation11 + $0x60] sm:$0xf]
        %v1540 = vld [vmem:[#allocation11 + $0x64] sm:$0xf]
        %v1541 = vld [vmem:[#allocation11 + $0x68] sm:$0xf]
        %v1542 = vld [vmem:[#allocation11 + $0x6c] sm:$0xf]
        %v1543 = vld [vmem:[#allocation11 + $0x70] sm:$0xf]
        %v1544 = vld [vmem:[#allocation11 + $0x74] sm:$0xf]
        %v1545 = vld [vmem:[#allocation11 + $0x78] sm:$0xf]
        %v1546 = vld [vmem:[#allocation11 + $0x7c] sm:$0xf]
        %v1547 = vld [vmem:[#allocation11 + $0x80] sm:$0xf]
        %v1548 = vld [vmem:[#allocation11 + $0x84] sm:$0xf]
        %v1549 = vld [vmem:[#allocation11 + $0x88] sm:$0xf]
        %v1550 = vld [vmem:[#allocation11 + $0x8c] sm:$0xf]
        %v1551 = vld [vmem:[#allocation11 + $0x90] sm:$0xf]
        %v1552 = vld [vmem:[#allocation11 + $0x94] sm:$0xf]
        %v1553 = vld [vmem:[#allocation11 + $0x98] sm:$0xf]
        %v1554 = vld [vmem:[#allocation11 + $0x9c] sm:$0xf]
        %v1555 = vld [vmem:[#allocation11 + $0xa0] sm:$0xf]
        %v1556 = vld [vmem:[#allocation11 + $0xa4] sm:$0xf]
        %v1557 = vld [vmem:[#allocation11 + $0xa8] sm:$0xf]
        %v1558 = vld [vmem:[#allocation11 + $0xac] sm:$0xf]
        %v1559 = vld [vmem:[#allocation11 + $0xb0] sm:$0xf]
        %v1560 = vld [vmem:[#allocation11 + $0xb4] sm:$0xf]
        %v1561 = vld [vmem:[#allocation11 + $0xb8] sm:$0xf]
        %v1562 = vld [vmem:[#allocation11 + $0xbc] sm:$0xf]
        %v1563 = vld [vmem:[#allocation11 + $0xc0] sm:$0xf]
        %v1564 = vld [vmem:[#allocation11 + $0xc4] sm:$0xf]
        %v1565 = vld [vmem:[#allocation11 + $0xc8] sm:$0xf]
        %v1566 = vld [vmem:[#allocation11 + $0xcc] sm:$0xf]
        %v1567 = vld [vmem:[#allocation11 + $0xd0] sm:$0xf]
        %v1568 = vld [vmem:[#allocation11 + $0xd4] sm:$0xf]
        %v1569 = vld [vmem:[#allocation11 + $0xd8] sm:$0xf]
        %v1570 = vld [vmem:[#allocation11 + $0xdc] sm:$0xf]
        %v1571 = vld [vmem:[#allocation11 + $0xe0] sm:$0xf]
        %v1572 = vld [vmem:[#allocation11 + $0xe4] sm:$0xf]
        %v1573 = vld [vmem:[#allocation11 + $0xe8] sm:$0xf]
        %v1574 = vld [vmem:[#allocation11 + $0xec] sm:$0xf]
        %v1575 = vld [vmem:[#allocation11 + $0xf0] sm:$0xf]
        %v1576 = vld [vmem:[#allocation11 + $0xf4] sm:$0xf]
        %v1577 = vld [vmem:[#allocation11 + $0xf8] sm:$0xf]
        %v1578 = vld [vmem:[#allocation11 + $0xfc] sm:$0xf]
        %v1579 = vld [vmem:[%s3] sm:$0x1]
        %v1581 = vlaneseq
        %v1582 = vshrl.u32 %v1581, 7
        %v1583 = vsub.s32 0, %v1582
        %v1584 = vrot.slane %v1579, %v1583
        %v1588 = vunpack.c.l.b16 %v1513
        %v1589 = vunpack.c.h.b16 %v1513
        %v1590 = vunpack.c.l.b16 %v1514
        %v1591 = vunpack.c.h.b16 %v1514
        %v1592 = vpack.c.b16 %v1588, %v1588
        %v1593 = vpack.c.b16 %v1589, %v1589
        %v1594 = vpack.c.b16 %v1590, %v1590
        %v1595 = vpack.c.b16 %v1591, %v1591
        %v1664 = vunpack.c.l.b16 %v1515
        %v1665 = vunpack.c.l.b16 %v1516
        %v1666 = vunpack.c.l.b16 %v1517
        %v1667 = vunpack.c.l.b16 %v1518
        %v1668 = vunpack.c.l.b16 %v1519
        %v1669 = vunpack.c.l.b16 %v1520
        %v1670 = vunpack.c.l.b16 %v1521
        %v1671 = vunpack.c.l.b16 %v1522
        %v1672 = vunpack.c.l.b16 %v1523
        %v1673 = vunpack.c.l.b16 %v1524
        %v1674 = vunpack.c.l.b16 %v1525
        %v1675 = vunpack.c.l.b16 %v1526
        %v1676 = vunpack.c.l.b16 %v1527
        %v1677 = vunpack.c.l.b16 %v1528
        %v1678 = vunpack.c.l.b16 %v1529
        %v1679 = vunpack.c.l.b16 %v1530
        %v1680 = vunpack.c.l.b16 %v1531
        %v1681 = vunpack.c.l.b16 %v1532
        %v1682 = vunpack.c.l.b16 %v1533
        %v1683 = vunpack.c.l.b16 %v1534
        %v1684 = vunpack.c.l.b16 %v1535
        %v1685 = vunpack.c.l.b16 %v1536
        %v1686 = vunpack.c.l.b16 %v1537
        %v1687 = vunpack.c.l.b16 %v1538
        %v1688 = vunpack.c.l.b16 %v1539
        %v1689 = vunpack.c.l.b16 %v1540
        %v1690 = vunpack.c.l.b16 %v1541
        %v1691 = vunpack.c.l.b16 %v1542
        %v1692 = vunpack.c.l.b16 %v1543
        %v1693 = vunpack.c.l.b16 %v1544
        %v1694 = vunpack.c.l.b16 %v1545
        %v1695 = vunpack.c.l.b16 %v1546
        %v1696 = vunpack.c.l.b16 %v1547
        %v1697 = vunpack.c.l.b16 %v1548
        %v1698 = vunpack.c.l.b16 %v1549
        %v1699 = vunpack.c.l.b16 %v1550
        %v1700 = vunpack.c.l.b16 %v1551
        %v1701 = vunpack.c.l.b16 %v1552
        %v1702 = vunpack.c.l.b16 %v1553
        %v1703 = vunpack.c.l.b16 %v1554
        %v1704 = vunpack.c.l.b16 %v1555
        %v1705 = vunpack.c.l.b16 %v1556
        %v1706 = vunpack.c.l.b16 %v1557
        %v1707 = vunpack.c.l.b16 %v1558
        %v1708 = vunpack.c.l.b16 %v1559
        %v1709 = vunpack.c.l.b16 %v1560
        %v1710 = vunpack.c.l.b16 %v1561
        %v1711 = vunpack.c.l.b16 %v1562
        %v1712 = vunpack.c.l.b16 %v1563
        %v1713 = vunpack.c.l.b16 %v1564
        %v1714 = vunpack.c.l.b16 %v1565
        %v1715 = vunpack.c.l.b16 %v1566
        %v1716 = vunpack.c.l.b16 %v1567
        %v1717 = vunpack.c.l.b16 %v1568
        %v1718 = vunpack.c.l.b16 %v1569
        %v1719 = vunpack.c.l.b16 %v1570
        %v1720 = vunpack.c.l.b16 %v1571
        %v1721 = vunpack.c.l.b16 %v1572
        %v1722 = vunpack.c.l.b16 %v1573
        %v1723 = vunpack.c.l.b16 %v1574
        %v1724 = vunpack.c.l.b16 %v1575
        %v1725 = vunpack.c.l.b16 %v1576
        %v1726 = vunpack.c.l.b16 %v1577
        %v1727 = vunpack.c.l.b16 %v1578
        %v1728 = vpack.c.b16 %v1665, %v1664
        %v1729 = vpack.c.b16 %v1667, %v1666
        %v1730 = vpack.c.b16 %v1669, %v1668
        %v1731 = vpack.c.b16 %v1671, %v1670
        %v1732 = vpack.c.b16 %v1673, %v1672
        %v1733 = vpack.c.b16 %v1675, %v1674
        %v1734 = vpack.c.b16 %v1677, %v1676
        %v1735 = vpack.c.b16 %v1679, %v1678
        %v1736 = vpack.c.b16 %v1681, %v1680
        %v1737 = vpack.c.b16 %v1683, %v1682
        %v1738 = vpack.c.b16 %v1685, %v1684
        %v1739 = vpack.c.b16 %v1687, %v1686
        %v1740 = vpack.c.b16 %v1689, %v1688
        %v1741 = vpack.c.b16 %v1691, %v1690
        %v1742 = vpack.c.b16 %v1693, %v1692
        %v1743 = vpack.c.b16 %v1695, %v1694
        %v1744 = vpack.c.b16 %v1697, %v1696
        %v1745 = vpack.c.b16 %v1699, %v1698
        %v1746 = vpack.c.b16 %v1701, %v1700
        %v1747 = vpack.c.b16 %v1703, %v1702
        %v1748 = vpack.c.b16 %v1705, %v1704
        %v1749 = vpack.c.b16 %v1707, %v1706
        %v1750 = vpack.c.b16 %v1709, %v1708
        %v1751 = vpack.c.b16 %v1711, %v1710
        %v1752 = vpack.c.b16 %v1713, %v1712
        %v1753 = vpack.c.b16 %v1715, %v1714
        %v1754 = vpack.c.b16 %v1717, %v1716
        %v1755 = vpack.c.b16 %v1719, %v1718
        %v1756 = vpack.c.b16 %v1721, %v1720
        %v1757 = vpack.c.b16 %v1723, %v1722
        %v1758 = vpack.c.b16 %v1725, %v1724
        %v1759 = vpack.c.b16 %v1727, %v1726
        %1792 = vmatprep.subr.bf16.mxu0 0
        %1793 = vmatpush1.bf16.msra.mxu0 %v1728
        %1794 = vmatprep.subr.bf16.mxu0 0
        %1795 = vmatpush1.bf16.msra.mxu0 %v1729
        %1796 = vmatprep.subr.bf16.mxu0 0
        %1797 = vmatpush1.bf16.msra.mxu0 %v1730
        %1798 = vmatprep.subr.bf16.mxu0 0
        %1799 = vmatpush1.bf16.msra.mxu0 %v1731
        %1800 = vmatprep.subr.bf16.mxu0 0
        %1801 = vmatpush1.bf16.msra.mxu0 %v1732
        %1802 = vmatprep.subr.bf16.mxu0 0
        %1803 = vmatpush1.bf16.msra.mxu0 %v1733
        %1804 = vmatprep.subr.bf16.mxu0 0
        %1805 = vmatpush1.bf16.msra.mxu0 %v1734
        %1806 = vmatprep.subr.bf16.mxu0 0
        %1807 = vmatpush1.bf16.msra.mxu0 %v1735
        %1808 = vmatprep.subr.bf16.mxu0 0
        %1809 = vmatpush1.bf16.msra.mxu0 %v1736
        %1810 = vmatprep.subr.bf16.mxu0 0
        %1811 = vmatpush1.bf16.msra.mxu0 %v1737
        %1812 = vmatprep.subr.bf16.mxu0 0
        %1813 = vmatpush1.bf16.msra.mxu0 %v1738
        %1814 = vmatprep.subr.bf16.mxu0 0
        %1815 = vmatpush1.bf16.msra.mxu0 %v1739
        %1816 = vmatprep.subr.bf16.mxu0 0
        %1817 = vmatpush1.bf16.msra.mxu0 %v1740
        %1818 = vmatprep.subr.bf16.mxu0 0
        %1819 = vmatpush1.bf16.msra.mxu0 %v1741
        %1820 = vmatprep.subr.bf16.mxu0 0
        %1821 = vmatpush1.bf16.msra.mxu0 %v1742
        %1822 = vmatprep.subr.bf16.mxu0 0
        %1823 = vmatpush1.bf16.msra.mxu0 %v1743
        %1824 = vmatprep.mubr.bf16.mxu0 %v1593
        %1825 = vmatmul.mubr.bf16.gmra.mrb[0].mxu0 %v1592
        %v1826 = vpop.f32.mrb[0].mxu0
        %v1827 = vadd.f32 %v1584, %v1826
        %v1828 = vpop.f32.mrb[0].mxu0
        %v1829 = vpop.f32.mrb[0].mxu0
        %v1830 = vpop.f32.mrb[0].mxu0
        %1831 = vdwg.mxu0
        %1832 = vmatprep.subr.bf16.mxu0 0
        %1833 = vmatpush1.bf16.msra.mxu0 %v1744
        %1834 = vmatprep.subr.bf16.mxu0 0
        %1835 = vmatpush1.bf16.msra.mxu0 %v1745
        %1836 = vmatprep.subr.bf16.mxu0 0
        %1837 = vmatpush1.bf16.msra.mxu0 %v1746
        %1838 = vmatprep.subr.bf16.mxu0 0
        %1839 = vmatpush1.bf16.msra.mxu0 %v1747
        %1840 = vmatprep.subr.bf16.mxu0 0
        %1841 = vmatpush1.bf16.msra.mxu0 %v1748
        %1842 = vmatprep.subr.bf16.mxu0 0
        %1843 = vmatpush1.bf16.msra.mxu0 %v1749
        %1844 = vmatprep.subr.bf16.mxu0 0
        %1845 = vmatpush1.bf16.msra.mxu0 %v1750
        %1846 = vmatprep.subr.bf16.mxu0 0
        %1847 = vmatpush1.bf16.msra.mxu0 %v1751
        %1848 = vmatprep.subr.bf16.mxu0 0
        %1849 = vmatpush1.bf16.msra.mxu0 %v1752
        %1850 = vmatprep.subr.bf16.mxu0 0
        %1851 = vmatpush1.bf16.msra.mxu0 %v1753
        %1852 = vmatprep.subr.bf16.mxu0 0
        %1853 = vmatpush1.bf16.msra.mxu0 %v1754
        %1854 = vmatprep.subr.bf16.mxu0 0
        %1855 = vmatpush1.bf16.msra.mxu0 %v1755
        %1856 = vmatprep.subr.bf16.mxu0 0
        %1857 = vmatpush1.bf16.msra.mxu0 %v1756
        %1858 = vmatprep.subr.bf16.mxu0 0
        %1859 = vmatpush1.bf16.msra.mxu0 %v1757
        %1860 = vmatprep.subr.bf16.mxu0 0
        %1861 = vmatpush1.bf16.msra.mxu0 %v1758
        %1862 = vmatprep.subr.bf16.mxu0 0
        %1863 = vmatpush1.bf16.msra.mxu0 %v1759
        %1864 = vmatprep.mubr.bf16.mxu0 %v1595
        %1865 = vmatmul.mubr.bf16.gmra.mrb[0].mxu0 %v1594
        %v1866 = vpop.f32.mrb[0].mxu0
        %v1867 = vadd.f32 %v1827, %v1866
        %v1868 = vpop.f32.mrb[0].mxu0
        %v1869 = vpop.f32.mrb[0].mxu0
        %v1870 = vpop.f32.mrb[0].mxu0
        %1871 = vdwg.mxu0
        %v1872 = vpack.c.bf16 %v1867, %v1867
        %1873 = vst [vmem:[%s241] sm:$0xf] %v1872
        %s1874 = sand.u32 %s119, 1
        %s1875 = scalar_lea.sflag [#allocation8], %s1874
        %s1876 = sand.u32 %s119, 1
        %s1877 = smul.addr %s1876, 4
        %s1878 = scalar_lea.vmem [#allocation12], %s1877
        // Predicated region
        $region49: #{tpu_custom_call.1} parent=35 // pred_check
          %p1879 = pneg %p129
        $region50: #{tpu_custom_call.1} parent=35 // pred_check_branch
          %1881 = sbr.rel (%p1879) target = $region52
        $region51: #{tpu_custom_call.1} parent=35 // pred_region
          %s1883 = ssub.s32 64, 64
          %1884 = vsyncadd %s1875, %s1883
          %s1885 = smul.addr %s22, 64
          %s1886 = scalar_lea.hbm %s4, %s1885
          %s1888 = sshll.u32 %s1878, 4
          %s1889 = int_to_ptr.vmem [resolvable:$true] %s1888
          %1891 = dma.vmem_to_hbm [thread:$0]  %s1889, 64, %s1886, %s1875
        $region52: #{tpu_custom_call.1} parent=35 // pred_fallthru
          _
      $region36: #{tpu_custom_call.1} parent=5 // pred_fallthru
        _
      %p1892 = scmp.le.s32.totalorder 2, %s17
      // Predicated region
      $region53: #{tpu_custom_call.1} parent=5 // pred_check
        %p1893 = pneg %p1892
      $region54: #{tpu_custom_call.1} parent=5 // pred_check_branch
        %1895 = sbr.rel (%p1893) target = $region56
      $region55: #{tpu_custom_call.1} parent=5 // pred_region
        %s1896 = ssub.s32 %s17, 2
        // Predicated region
        $region57: #{tpu_custom_call.1} parent=55 // pred_check
          %p1897 = pneg %p135
        $region58: #{tpu_custom_call.1} parent=55 // pred_check_branch
          %1899 = sbr.rel (%p1897) target = $region60
        $region59: #{tpu_custom_call.1} parent=55 // pred_region
          %s1900 = sand.u32 %s120, 1
          %s1901 = scalar_lea.sflag [#allocation8], %s1900
          %s1902 = sand.u32 %s120, 1
          %s1903 = smul.addr %s1902, 4
          %s1904 = scalar_lea.vmem [#allocation12], %s1903
          %1905 = dma.done %s1901, 64
        $region60: #{tpu_custom_call.1} parent=55 // pred_fallthru
          _
      $region56: #{tpu_custom_call.1} parent=5 // pred_fallthru
        _
    $region6: #{tpu_custom_call.1} parent=1 // loop_footer
      %s21 = sadd.s32 1, %s17
    $region7: #{tpu_custom_call.1} parent=1 // loop_footer_branch
      %16 = sbr.rel target = $region3
    $region8: #{tpu_custom_call.1} parent=1 // loop_exit
      _
    %1906 = vsyncpa [#allocation7], 1
    %s1907 = scalar_lea.sflag [#allocation7], 1
    %1908 = vsyncpa %s1907, 1
    %1909 = vsyncpa [#allocation10], 1
    %1910 = vsyncpa [#allocation8], 1
    %s1911 = scalar_lea.sflag [#allocation8], 1
    %1912 = vsyncpa %s1911, 1

</llo_original>
